<compile_context>
chip_gen: v5e
topology: v5e:2x2
jax: 0.10.0
libtpu: 0.0.40
codegen_flags: <defaults>
</compile_context>

<pallas_src>
import functools

import numpy as np
import jax
import jax.numpy as jnp
from jax.experimental import pallas as pl
from jax.experimental.pallas import tpu as pltpu

MIN_GRAM = 2
MAX_GRAM = 5
NUM_GRAMS = MAX_GRAM - MIN_GRAM + 1  # 4
_LANE = 128


def _round_up(x, m):
    return (x + m - 1) // m * m


# ---------------------------------------------------------------------------
# Chip-aware VMEM budgeting and BlockSpec helpers
# ---------------------------------------------------------------------------
def _vmem_budget():
    """(per-step tile byte budget, vmem_limit_bytes) for the local chip.

    v5e / v6e have 128 MiB of VMEM -> raise the scoped limit to 96 MiB and let
    tiles grow; v7x only has 64 MiB -> stay conservative.  Falls back to the
    smallest (v7x-sized) numbers if the query is unavailable."""
    try:
        cap = int(pltpu.get_tpu_info().vmem_capacity_bytes)
    except Exception:
        cap = 64 * 1024 * 1024
    limit = min(cap * 3 // 4, 96 * 1024 * 1024)
    return (limit * 3) // 5, limit


@functools.lru_cache(maxsize=None)
def _buffered_const_ok():
    """Probe whether pipeline_mode=pl.Buffered(1) works on this runtime.

    Single-buffering grid-invariant operands halves their VMEM footprint
    (they are fetched exactly once anyway); fall back to default double
    buffering if the runtime rejects it."""
    try:
        def _k(x_ref, o_ref):
            o_ref[...] = x_ref[...]

        fn = pl.pallas_call(
            _k,
            out_shape=jax.ShapeDtypeStruct((16, 128), jnp.float32),
            grid=(2,),
            in_specs=[pl.BlockSpec((8, 128), lambda i: (0, 0),
                                   pipeline_mode=pl.Buffered(1))],
            out_specs=pl.BlockSpec((8, 128), lambda i: (i, 0)),
        )
        jax.block_until_ready(fn(jnp.zeros((8, 128), jnp.float32)))
        return True
    except Exception:
        return False


def _const_spec(block_shape):
    """BlockSpec for an operand whose block index never changes with the grid."""
    ndim = len(block_shape)
    index_map = lambda *_: (0,) * ndim
    if _buffered_const_ok():
        return pl.BlockSpec(block_shape, index_map, pipeline_mode=pl.Buffered(1))
    return pl.BlockSpec(block_shape, index_map)


def _pick_batch_tile(nb, row_bytes, budget):
    """Largest divisor-of-nb batch tile whose per-step footprint fits `budget`.

    Prefers 8-aligned tiles with >= 2 grid steps (keeps both v7x TensorCores
    busy and lets the BlockSpec pipeline overlap DMA with compute); tiny
    batches fall back to a single full-size step."""
    aligned = [t for t in range(8, nb, 8) if nb % t == 0]
    fitting = [t for t in aligned if t * row_bytes <= budget]
    if fitting:
        return max(fitting)
    if nb * row_bytes <= budget:
        return nb
    if aligned:
        return min(aligned)
    return nb


# ---------------------------------------------------------------------------
# Pallas kernels
# ---------------------------------------------------------------------------
def _cnn_encoder_kernel(x_ref, w_ref, b_ref, mask_ref, out_ref, *, seq_pad):
    """x: (TB*Sp, Ep) bf16; w: (T*Ep, N) bf16; b: (1, N) f32; mask: (Sp, N) f32;
    out: (TB, N) bf16."""
    n_rows, e_pad = x_ref.shape
    n_taps = w_ref.shape[0] // e_pad
    tb = n_rows // seq_pad

    # Windowed input: lane-block i holds x shifted up by i rows, so ONE deep-K
    # bf16 MXU matmul covers every tap of every gram.  Rolls run on the f32
    # copy (packed-bf16 sublane rotates are not guaranteed to lower) and any
    # wrapped rows land only on positions the per-gram mask zeroes out.
    x2 = x_ref[...]
    x32 = x2.astype(jnp.float32)
    cols = [x2]
    for i in range(1, n_taps):
        cols.append(pltpu.roll(x32, shift=n_rows - i, axis=0).astype(x2.dtype))
    xw = jnp.concatenate(cols, axis=1)                       # (M, T*Ep) bf16

    y = jnp.dot(xw, w_ref[...], preferred_element_type=jnp.float32)
    y = jnp.maximum(y + b_ref[...], 0.0)                     # bias + ReLU
    y3 = y.reshape(tb, seq_pad, y.shape[-1])                 # layout-free: Sp % 8 == 0
    y3 = y3 * mask_ref[...]                                  # zero-mask (safe: ReLU >= 0)
    out_ref[...] = jnp.max(y3, axis=1).astype(out_ref.dtype)


def _bilinear_kernel(q_ref, c_ref, w2_ref, g_ref, b_ref, out_ref):
    """q, c: (TB, Hp) bf16; w2: (Hp, K*Hp) bf16; g: (K*Hp, 128) bf16;
    b: (1, 128) f32; out: (TB, 128) f32.  s[b,k] = q[b] @ W[k] @ c[b] + bias[k]."""
    hp = q_ref.shape[1]
    k = w2_ref.shape[1] // hp
    v = jnp.dot(c_ref[...], w2_ref[...],
                preferred_element_type=jnp.float32)           # (TB, K*Hp)
    qt = jnp.concatenate([q_ref[...]] * k, axis=1)            # (TB, K*Hp) bf16
    p = (qt.astype(jnp.float32) * v).astype(jnp.bfloat16)
    s = jnp.dot(p, g_ref[...], preferred_element_type=jnp.float32)  # lane-dense (TB, 128)
    out_ref[...] = s + b_ref[...]


# ---------------------------------------------------------------------------
# Wrappers
# ---------------------------------------------------------------------------
def cnn_encoder(x_flat, w_win, conv_bias, mask, seq_pad):
    """x_flat: (NB*Sp, Ep) bf16 -> (NB, n_pad) bf16 CNN features (lane-padded)."""
    n_rows, e_pad = x_flat.shape
    nb = n_rows // seq_pad
    kk, n_pad = w_win.shape
    n_taps = kk // e_pad

    budget, vmem_limit = _vmem_budget()
    const_bytes = kk * n_pad * 2 + n_pad * 4 + seq_pad * n_pad * 4
    row_bytes = (seq_pad * e_pad * 2 * 2               # x block (bf16, 2 buffers)
                 + seq_pad * e_pad * (n_taps + 2) * 2  # windowed copy + f32 roll temp
                 + seq_pad * n_pad * 4 * 2             # f32 matmul result + masked copy
                 + n_pad * 2 * 2)                      # bf16 output block (2 buffers)
    tb = _pick_batch_tile(nb, row_bytes, max(budget - const_bytes, row_bytes))

    return pl.pallas_call(
        functools.partial(_cnn_encoder_kernel, seq_pad=seq_pad),
        out_shape=jax.ShapeDtypeStruct((nb, n_pad), jnp.bfloat16),
        grid=(nb // tb,),
        in_specs=[
            pl.BlockSpec((tb * seq_pad, e_pad), lambda i: (i, 0)),
            _const_spec((kk, n_pad)),
            _const_spec((1, n_pad)),
            _const_spec((seq_pad, n_pad)),
        ],
        out_specs=pl.BlockSpec((tb, n_pad), lambda i: (i, 0)),
        compiler_params=pltpu.CompilerParams(
            dimension_semantics=("parallel",),
            vmem_limit_bytes=vmem_limit),
    )(x_flat, w_win, conv_bias, mask)


def bilinear(q, c, w2, g_sel, bias_pad):
    """q, c: (B, Hp) bf16 -> (B, 128) f32 logits (valid in lanes [0, K))."""
    nb, hp = q.shape
    khp = w2.shape[1]

    budget, vmem_limit = _vmem_budget()
    const_bytes = hp * khp * 2 + khp * _LANE * 2 + _LANE * 4
    row_bytes = (hp * 2 * 2 * 2        # q + c blocks (bf16, 2 buffers)
                 + khp * 4 * 2         # v + f32 product
                 + khp * 2 * 2         # qt + p (bf16)
                 + _LANE * 4 * 2)      # f32 output block (2 buffers)
    tb = _pick_batch_tile(nb, row_bytes, max(budget - const_bytes, row_bytes))

    return pl.pallas_call(
        _bilinear_kernel,
        out_shape=jax.ShapeDtypeStruct((nb, _LANE), jnp.float32),
        grid=(nb // tb,),
        in_specs=[
            pl.BlockSpec((tb, hp), lambda i: (i, 0)),
            pl.BlockSpec((tb, hp), lambda i: (i, 0)),
            _const_spec((hp, khp)),
            _const_spec((khp, _LANE)),
            _const_spec((1, _LANE)),
        ],
        out_specs=pl.BlockSpec((tb, _LANE), lambda i: (i, 0)),
        compiler_params=pltpu.CompilerParams(
            dimension_semantics=("parallel",),
            vmem_limit_bytes=vmem_limit),
    )(q, c, w2, g_sel, bias_pad)


# ---------------------------------------------------------------------------
# Parameter packing and forward pass
# ---------------------------------------------------------------------------
def init_params(key, vocab_size, hidden_size, num_classes=4):
    assert hidden_size % 4 == 0
    output_dim = hidden_size // 4
    n_feat = NUM_GRAMS * output_dim                    # == hidden_size
    n_pad = _round_up(max(n_feat, _LANE), _LANE)
    e_pad = _round_up(max(hidden_size, _LANE), _LANE)

    keys = jax.random.split(key, 2 + 2 * NUM_GRAMS + 2)

    # Embedding stored bf16, lane-padded: halves gather/activation HBM traffic
    # and keeps the in-kernel lane-concat 128-aligned.
    emb = np.zeros((vocab_size, e_pad), np.float32)
    emb[:, :hidden_size] = 0.1 * np.asarray(
        jax.random.normal(keys[0], (vocab_size, hidden_size), jnp.float32))
    params = {"embedding": jnp.asarray(emb, jnp.bfloat16)}

    # Conv2d(1, O, (a, E)) weights (O, a, E) packed as one windowed weight
    # (MAX_GRAM*Ep, n_pad): rows [i*Ep, i*Ep+E) hold tap i of every gram
    # (zero columns for grams narrower than i+1).
    w_win = np.zeros((MAX_GRAM * e_pad, n_pad), np.float32)
    bias = np.zeros((1, n_pad), np.float32)
    gram_m1 = np.full((1, n_pad), 2 ** 30, np.int32)   # huge => masked (pad cols)
    for g, a in enumerate(range(MIN_GRAM, MAX_GRAM + 1)):
        w = np.asarray(0.1 * jax.random.normal(
            keys[1 + 2 * g], (output_dim, a, hidden_size), jnp.float32))
        b = np.asarray(0.1 * jax.random.normal(
            keys[2 + 2 * g], (output_dim,), jnp.float32))
        cols = slice(g * output_dim, (g + 1) * output_dim)
        for i in range(a):
            w_win[i * e_pad:i * e_pad + hidden_size, cols] = w[:, i, :].T
        bias[0, cols] = b
        gram_m1[0, cols] = a - 1
    params["w_win"] = jnp.asarray(w_win, jnp.bfloat16)
    params["conv_bias"] = jnp.asarray(bias)
    params["gram_m1"] = jnp.asarray(gram_m1)

    # nn.Bilinear(H, H, K): W (K, Hq, Hc) packed as (n_pad, K*n_pad) so the
    # lane-padded encoder features feed it directly (no inter-kernel slice);
    # padded rows/cols are zero.  Selector does the grouped sum over each
    # k-block into a lane-dense 128-wide output.
    w_bi = np.asarray(0.1 * jax.random.normal(
        keys[-2], (num_classes, hidden_size, hidden_size), jnp.float32))
    w2 = np.zeros((n_pad, num_classes * n_pad), np.float32)
    sel = np.zeros((num_classes * n_pad, _LANE), np.float32)
    for k in range(num_classes):
        w2[:hidden_size, k * n_pad:k * n_pad + hidden_size] = w_bi[k].T
        sel[k * n_pad:(k + 1) * n_pad, k] = 1.0
    params["bilinear_w2"] = jnp.asarray(w2, jnp.bfloat16)
    params["bilinear_sel"] = jnp.asarray(sel, jnp.bfloat16)

    b_bi = np.zeros((1, _LANE), np.float32)
    b_bi[0, :num_classes] = np.asarray(0.1 * jax.random.normal(
        keys[-1], (num_classes,), jnp.float32))
    params["bilinear_b"] = jnp.asarray(b_bi)
    return params


def textcnn_forward(params, q_ids, c_ids, label):
    """Equivalent of TextCNN.forward(data, ..., mode='train') -> (logits, loss).
    NOTE: runs conv/bilinear matmuls in bf16 -> small deviation vs f32 PyTorch."""
    e_pad = params["embedding"].shape[1]
    n_pad = params["w_win"].shape[1]
    K = params["bilinear_sel"].shape[0] // n_pad
    B, S = q_ids.shape
    assert S >= MAX_GRAM, "sequence shorter than max_gram (PyTorch conv fails too)"
    s_pad = _round_up(S, 8)   # keeps the in-kernel (tb, S, N) reshape layout-free

    # Pad the ids (token 0) rather than the embedded activations: avoids an
    # extra HBM pass; padded positions are zeroed by the mask below.
    ids = jnp.concatenate([q_ids, c_ids], axis=0)                  # (2B, S)
    if s_pad != S:
        ids = jnp.pad(ids, ((0, 0), (0, s_pad - S)))
    # TODO(synk): fuse this gather into the encoder kernel (scalar-prefetch ids
    # + per-row DMA gather) to remove the x_flat HBM round trip entirely.
    x = jnp.take(params["embedding"], ids, axis=0)                 # (2B, Sp, Ep) bf16
    x_flat = x.reshape(2 * B * s_pad, e_pad)

    # Per-(position, feature-column) validity mask, computed once per call:
    # position t is valid for gram a iff t < S - (a - 1).
    pos = jnp.arange(s_pad, dtype=jnp.int32)[:, None]
    mask = (pos < (S - params["gram_m1"])).astype(jnp.float32)     # (Sp, n_pad)

    # Single fused encoder launch over [q; c].
    feats = cnn_encoder(x_flat, params["w_win"], params["conv_bias"],
                        mask, s_pad)                               # (2B, n_pad) bf16
    q_feat, c_feat = feats[:B], feats[B:]

    out = bilinear(q_feat, c_feat, params["bilinear_w2"],
                   params["bilinear_sel"], params["bilinear_b"])   # (B, 128) f32
    logits = out[:, :K]

    # nn.CrossEntropyLoss (mean reduction) in plain JAX (tiny glue).
    logp = jax.nn.log_softmax(logits, axis=-1)
    loss = -jnp.mean(jnp.take_along_axis(logp, label[:, None], axis=1))
    return logits, loss


if __name__ == "__main__":
    VOCAB, HIDDEN, BATCH, SEQ, NUM_CLASSES = 100, 32, 2, 8, 4

    key = jax.random.PRNGKey(0)
    pkey, qkey, ckey, lkey = jax.random.split(key, 4)
    params = init_params(pkey, VOCAB, HIDDEN, NUM_CLASSES)

    q_ids = jax.random.randint(qkey, (BATCH, SEQ), 0, VOCAB, dtype=jnp.int32)
    c_ids = jax.random.randint(ckey, (BATCH, SEQ), 0, VOCAB, dtype=jnp.int32)
    label = jax.random.randint(lkey, (BATCH,), 0, NUM_CLASSES, dtype=jnp.int32)

    _buffered_const_ok()   # warm the capability probe outside the trace

    logits, loss = jax.jit(textcnn_forward)(params, q_ids, c_ids, label)
    jax.block_until_ready((logits, loss))

    assert logits.shape == (BATCH, NUM_CLASSES)
    assert loss.shape == ()
    assert bool(jnp.isfinite(loss))
    print("KERNEL_OK")
</pallas_src>

<mosaic_0001>
module attributes {stable_mosaic.version = 11 : i64} {
  func.func @_k(%arg0: i32, %arg1: memref<8x128xf32, #tpu.memory_space<vmem>>, %arg2: memref<8x128xf32, #tpu.memory_space<vmem>>) attributes {dimension_semantics = [#tpu.dimension_semantics<arbitrary>], iteration_bounds = array<i64: 2>, scalar_prefetch = 0 : i64, scratch_operands = 0 : i64, tpu.core_type = #tpu.core_type<tc>, window_params = [{pipeline_mode = #tpu.pipeline_mode<synchronous>, transform_indices = @transform_0, window_bounds = array<i64: 8, 128>}, {transform_indices = @transform_1, window_bounds = array<i64: 8, 128>}]} {
    %c0 = arith.constant 0 : index
    %c0_0 = arith.constant 0 : index
    %0 = vector.load %arg1[%c0, %c0_0] : memref<8x128xf32, #tpu.memory_space<vmem>>, vector<8x128xf32>
    %c0_1 = arith.constant 0 : index
    %c0_2 = arith.constant 0 : index
    %1 = vector.load %arg2[%c0_1, %c0_2] : memref<8x128xf32, #tpu.memory_space<vmem>>, vector<8x128xf32>
    tpu.vector_store %arg2[%c0_1, %c0_2], %0 {strides = array<i32>} : memref<8x128xf32, #tpu.memory_space<vmem>>, vector<8x128xf32>,
    return
  }
  func.func @transform_0(%arg0: i32) -> (i32, i32) {
    %c0_i32 = arith.constant 0 : i32
    %c0_i32_0 = arith.constant 0 : i32
    %c0_i32_1 = arith.constant 0 : i32
    return %c0_i32, %c0_i32_0 : i32, i32
  }
  func.func @transform_1(%arg0: i32) -> (i32, i32) {
    %c0_i32 = arith.constant 0 : i32
    %c0_i32_0 = arith.constant 0 : i32
    return %arg0, %c0_i32 : i32, i32
  }
}

module attributes {stable_mosaic.version = 11 : i64} {
  func.func @_cnn_encoder_kernel(%arg0: i32, %arg1: memref<32x128xbf16, #tpu.memory_space<vmem>>, %arg2: memref<640x128xbf16, #tpu.memory_space<vmem>>, %arg3: memref<1x128xf32, #tpu.memory_space<vmem>>, %arg4: memref<8x128xf32, #tpu.memory_space<vmem>>, %arg5: memref<4x128xbf16, #tpu.memory_space<vmem>>) attributes {dimension_semantics = [#tpu.dimension_semantics<parallel>], iteration_bounds = array<i64: 1>, scalar_prefetch = 0 : i64, scratch_operands = 0 : i64, tpu.core_type = #tpu.core_type<tc>, window_params = [{transform_indices = @transform_0, window_bounds = array<i64: 32, 128>}, {pipeline_mode = #tpu.pipeline_mode<synchronous>, transform_indices = @transform_1, window_bounds = array<i64: 640, 128>}, {pipeline_mode = #tpu.pipeline_mode<synchronous>, transform_indices = @transform_2, window_bounds = array<i64: 1, 128>}, {pipeline_mode = #tpu.pipeline_mode<synchronous>, transform_indices = @transform_3, window_bounds = array<i64: 8, 128>}, {transform_indices = @transform_4, window_bounds = array<i64: 4, 128>}]} {
    %c0 = arith.constant 0 : index
    %c0_0 = arith.constant 0 : index
    %0 = vector.load %arg1[%c0, %c0_0] : memref<32x128xbf16, #tpu.memory_space<vmem>>, vector<32x128xbf16>
    %1 = arith.extf %0 : vector<32x128xbf16> to vector<32x128xf32>
    %c31_i32 = arith.constant 31 : i32
    %2 = tpu.dynamic_rotate %1 by %c31_i32 dim 0 : vector<32x128xf32>, i32 -> vector<32x128xf32>
    %3 = arith.truncf %2 : vector<32x128xf32> to vector<32x128xbf16>
    %c30_i32 = arith.constant 30 : i32
    %4 = tpu.dynamic_rotate %1 by %c30_i32 dim 0 : vector<32x128xf32>, i32 -> vector<32x128xf32>
    %5 = arith.truncf %4 : vector<32x128xf32> to vector<32x128xbf16>
    %c29_i32 = arith.constant 29 : i32
    %6 = tpu.dynamic_rotate %1 by %c29_i32 dim 0 : vector<32x128xf32>, i32 -> vector<32x128xf32>
    %7 = arith.truncf %6 : vector<32x128xf32> to vector<32x128xbf16>
    %c28_i32 = arith.constant 28 : i32
    %8 = tpu.dynamic_rotate %1 by %c28_i32 dim 0 : vector<32x128xf32>, i32 -> vector<32x128xf32>
    %9 = arith.truncf %8 : vector<32x128xf32> to vector<32x128xbf16>
    %10 = tpu.concatenate %0, %3, %5, %7, %9 in 1 : vector<32x128xbf16>, vector<32x128xbf16>, vector<32x128xbf16>, vector<32x128xbf16>, vector<32x128xbf16> -> vector<32x640xbf16>
    %c0_1 = arith.constant 0 : index
    %c0_2 = arith.constant 0 : index
    %11 = vector.load %arg2[%c0_1, %c0_2] : memref<640x128xbf16, #tpu.memory_space<vmem>>, vector<640x128xbf16>
    %cst = arith.constant dense<0.000000e+00> : vector<32x128xf32>
    %12 = tpu.matmul %10, %11, %cst {dimension_numbers = #tpu.dot_dimension_numbers<[1], [0], [0], [1], [0, 0, 1, 1], [], []>} : vector<32x640xbf16>, vector<640x128xbf16>, vector<32x128xf32> -> vector<32x128xf32>
    %c0_3 = arith.constant 0 : index
    %c0_4 = arith.constant 0 : index
    %13 = vector.load %arg3[%c0_3, %c0_4] : memref<1x128xf32, #tpu.memory_space<vmem>>, vector<1x128xf32>
    %14 = vector.broadcast %13 : vector<1x128xf32> to vector<32x128xf32>
    %15 = arith.addf %12, %14 : vector<32x128xf32>
    %cst_5 = arith.constant 0.000000e+00 : f32
    %16 = vector.broadcast %cst_5 : f32 to vector<32x128xf32>
    %17 = arith.maximumf %15, %16 : vector<32x128xf32>
    %18 = vector.shape_cast %17 : vector<32x128xf32> to vector<4x8x128xf32>
    %c0_6 = arith.constant 0 : index
    %c0_7 = arith.constant 0 : index
    %19 = vector.load %arg4[%c0_6, %c0_7] : memref<8x128xf32, #tpu.memory_space<vmem>>, vector<8x128xf32>
    %20 = vector.shape_cast %19 : vector<8x128xf32> to vector<1x8x128xf32>
    %21 = vector.broadcast %20 : vector<1x8x128xf32> to vector<4x8x128xf32>
    %22 = arith.mulf %18, %21 : vector<4x8x128xf32>
    %cst_8 = arith.constant dense<0xFF800000> : vector<4x128xf32>
    %23 = vector.multi_reduction <maximumf>, %22, %cst_8 [1] : vector<4x8x128xf32> to vector<4x128xf32>
    %24 = arith.truncf %23 : vector<4x128xf32> to vector<4x128xbf16>
    %c0_9 = arith.constant 0 : index
    %c0_10 = arith.constant 0 : index
    %25 = vector.load %arg5[%c0_9, %c0_10] : memref<4x128xbf16, #tpu.memory_space<vmem>>, vector<4x128xbf16>
    tpu.vector_store %arg5[%c0_9, %c0_10], %24 {strides = array<i32>} : memref<4x128xbf16, #tpu.memory_space<vmem>>, vector<4x128xbf16>,
    return
  }
  func.func @transform_0(%arg0: i32) -> (i32, i32) {
    %c0_i32 = arith.constant 0 : i32
    %c0_i32_0 = arith.constant 0 : i32
    return %arg0, %c0_i32 : i32, i32
  }
  func.func @transform_1(%arg0: i32) -> (i32, i32) {
    %c0_i32 = arith.constant 0 : i32
    %c0_i32_0 = arith.constant 0 : i32
    %c0_i32_1 = arith.constant 0 : i32
    return %c0_i32, %c0_i32_0 : i32, i32
  }
  func.func @transform_2(%arg0: i32) -> (i32, i32) {
    %c0_i32 = arith.constant 0 : i32
    %c0_i32_0 = arith.constant 0 : i32
    %c0_i32_1 = arith.constant 0 : i32
    return %c0_i32, %c0_i32_0 : i32, i32
  }
  func.func @transform_3(%arg0: i32) -> (i32, i32) {
    %c0_i32 = arith.constant 0 : i32
    %c0_i32_0 = arith.constant 0 : i32
    %c0_i32_1 = arith.constant 0 : i32
    return %c0_i32, %c0_i32_0 : i32, i32
  }
  func.func @transform_4(%arg0: i32) -> (i32, i32) {
    %c0_i32 = arith.constant 0 : i32
    %c0_i32_0 = arith.constant 0 : i32
    return %arg0, %c0_i32 : i32, i32
  }
}

module attributes {stable_mosaic.version = 11 : i64} {
  func.func @_bilinear_kernel(%arg0: i32, %arg1: memref<2x128xbf16, #tpu.memory_space<vmem>>, %arg2: memref<2x128xbf16, #tpu.memory_space<vmem>>, %arg3: memref<128x512xbf16, #tpu.memory_space<vmem>>, %arg4: memref<512x128xbf16, #tpu.memory_space<vmem>>, %arg5: memref<1x128xf32, #tpu.memory_space<vmem>>, %arg6: memref<2x128xf32, #tpu.memory_space<vmem>>) attributes {dimension_semantics = [#tpu.dimension_semantics<parallel>], iteration_bounds = array<i64: 1>, scalar_prefetch = 0 : i64, scratch_operands = 0 : i64, tpu.core_type = #tpu.core_type<tc>, window_params = [{transform_indices = @transform_0, window_bounds = array<i64: 2, 128>}, {transform_indices = @transform_1, window_bounds = array<i64: 2, 128>}, {pipeline_mode = #tpu.pipeline_mode<synchronous>, transform_indices = @transform_2, window_bounds = array<i64: 128, 512>}, {pipeline_mode = #tpu.pipeline_mode<synchronous>, transform_indices = @transform_3, window_bounds = array<i64: 512, 128>}, {pipeline_mode = #tpu.pipeline_mode<synchronous>, transform_indices = @transform_4, window_bounds = array<i64: 1, 128>}, {transform_indices = @transform_5, window_bounds = array<i64: 2, 128>}]} {
    %c0 = arith.constant 0 : index
    %c0_0 = arith.constant 0 : index
    %0 = vector.load %arg2[%c0, %c0_0] : memref<2x128xbf16, #tpu.memory_space<vmem>>, vector<2x128xbf16>
    %c0_1 = arith.constant 0 : index
    %c0_2 = arith.constant 0 : index
    %1 = vector.load %arg3[%c0_1, %c0_2] : memref<128x512xbf16, #tpu.memory_space<vmem>>, vector<128x512xbf16>
    %cst = arith.constant dense<0.000000e+00> : vector<2x512xf32>
    %2 = tpu.matmul %0, %1, %cst {dimension_numbers = #tpu.dot_dimension_numbers<[1], [0], [0], [1], [0, 0, 1, 1], [], []>} : vector<2x128xbf16>, vector<128x512xbf16>, vector<2x512xf32> -> vector<2x512xf32>
    %c0_3 = arith.constant 0 : index
    %c0_4 = arith.constant 0 : index
    %3 = vector.load %arg1[%c0_3, %c0_4] : memref<2x128xbf16, #tpu.memory_space<vmem>>, vector<2x128xbf16>
    %4 = tpu.concatenate %3, %3, %3, %3 in 1 : vector<2x128xbf16>, vector<2x128xbf16>, vector<2x128xbf16>, vector<2x128xbf16> -> vector<2x512xbf16>
    %5 = arith.extf %4 : vector<2x512xbf16> to vector<2x512xf32>
    %6 = arith.mulf %5, %2 : vector<2x512xf32>
    %7 = arith.truncf %6 : vector<2x512xf32> to vector<2x512xbf16>
    %c0_5 = arith.constant 0 : index
    %c0_6 = arith.constant 0 : index
    %8 = vector.load %arg4[%c0_5, %c0_6] : memref<512x128xbf16, #tpu.memory_space<vmem>>, vector<512x128xbf16>
    %cst_7 = arith.constant dense<0.000000e+00> : vector<2x128xf32>
    %9 = tpu.matmul %7, %8, %cst_7 {dimension_numbers = #tpu.dot_dimension_numbers<[1], [0], [0], [1], [0, 0, 1, 1], [], []>} : vector<2x512xbf16>, vector<512x128xbf16>, vector<2x128xf32> -> vector<2x128xf32>
    %c0_8 = arith.constant 0 : index
    %c0_9 = arith.constant 0 : index
    %10 = vector.load %arg5[%c0_8, %c0_9] : memref<1x128xf32, #tpu.memory_space<vmem>>, vector<1x128xf32>
    %11 = vector.broadcast %10 : vector<1x128xf32> to vector<2x128xf32>
    %12 = arith.addf %9, %11 : vector<2x128xf32>
    %c0_10 = arith.constant 0 : index
    %c0_11 = arith.constant 0 : index
    %13 = vector.load %arg6[%c0_10, %c0_11] : memref<2x128xf32, #tpu.memory_space<vmem>>, vector<2x128xf32>
    tpu.vector_store %arg6[%c0_10, %c0_11], %12 {strides = array<i32>} : memref<2x128xf32, #tpu.memory_space<vmem>>, vector<2x128xf32>,
    return
  }
  func.func @transform_0(%arg0: i32) -> (i32, i32) {
    %c0_i32 = arith.constant 0 : i32
    %c0_i32_0 = arith.constant 0 : i32
    return %arg0, %c0_i32 : i32, i32
  }
  func.func @transform_1(%arg0: i32) -> (i32, i32) {
    %c0_i32 = arith.constant 0 : i32
    %c0_i32_0 = arith.constant 0 : i32
    return %arg0, %c0_i32 : i32, i32
  }
  func.func @transform_2(%arg0: i32) -> (i32, i32) {
    %c0_i32 = arith.constant 0 : i32
    %c0_i32_0 = arith.constant 0 : i32
    %c0_i32_1 = arith.constant 0 : i32
    return %c0_i32, %c0_i32_0 : i32, i32
  }
  func.func @transform_3(%arg0: i32) -> (i32, i32) {
    %c0_i32 = arith.constant 0 : i32
    %c0_i32_0 = arith.constant 0 : i32
    %c0_i32_1 = arith.constant 0 : i32
    return %c0_i32, %c0_i32_0 : i32, i32
  }
  func.func @transform_4(%arg0: i32) -> (i32, i32) {
    %c0_i32 = arith.constant 0 : i32
    %c0_i32_0 = arith.constant 0 : i32
    %c0_i32_1 = arith.constant 0 : i32
    return %c0_i32, %c0_i32_0 : i32, i32
  }
  func.func @transform_5(%arg0: i32) -> (i32, i32) {
    %c0_i32 = arith.constant 0 : i32
    %c0_i32_0 = arith.constant 0 : i32
    return %arg0, %c0_i32 : i32, i32
  }
}

</mosaic_0001>

<llo_original>
// kernel: tpu_custom_call.1
$region0: #{tpu_custom_call.1}
  #allocation0 [shape = 'u32[]', space=smem, size = 0x4, offset = 0x4, fixed_abs, tag = 'smem constant byte address 0x4 - core index']
  #allocation1 [shape = 'u32[72,128]{1,0:T(1,128)}', space=vmem, size = 0x9000, scoped, tag = 'internal scratch']
  %s0 = inlined_call_operand.hbm [shape: f32[8,128], index: 0, kind: input, shape index: {}]
  %s1 = inlined_call_operand.hbm [shape: f32[16,128], index: 1, kind: output, shape index: {}]
  %s2 = sld [smem:[#allocation0]]
  $region41: #{tpu_custom_call.1} parent=0
    _
  %s4 = ssub.s32 1, %s2
  %s5 = scalar_select 0, %s4, %s2
  $region1: #{tpu_custom_call.1} parent=0
    #allocation2 [shape = 'u8[4096]{0}', space=vmem, size = 0x1000, scoped, tag = 'input window, operand 0, single buffered']
    #allocation3 [shape = 's32[2]{0}', space=sflag, size = 0x8, scoped, tag = 'scoped memory for tpu_custom_call.1']
    #allocation4 [shape = 's32[2]{0}', space=sflag, size = 0x8, scoped, tag = 'scoped memory for tpu_custom_call.1']
    #allocation5 [shape = 'u8[8192]{0}', space=vmem, size = 0x2000, scoped, tag = 'output window, operand 0']
    %6 = vsyncpa [#allocation3], 0
    %7 = vsyncpa [#allocation4], 0
    %s8 = scalar_lea.sflag [#allocation4], 1
    %9 = vsyncpa %s8, 0
    loop: start=0, step=1, limit=4
    $region2: #{tpu_custom_call.1} parent=1 // loop_pre_header
      _
    $region3: #{tpu_custom_call.1} parent=1 // loop_header
      %s11 = sphi 0, %s15
      %p12 = scmp.ge.s32.totalorder %s11, 4
      %s19 = sphi 0, %s19
      %s21 = sphi 0, %s19
      %s22 = sphi 0, %s21
      %s36 = sphi 0, %s22
      %s42 = sphi 0, %s44
      %s45 = sphi 0, %s42
      %s46 = sphi 0, %s45
      %s62 = sphi 0, %s46
    $region4: #{tpu_custom_call.1} parent=1 // loop_header_branch
      %14 = sbr.rel (%p12) target = $region8
    $region5: #{tpu_custom_call.1} parent=1 // loop_body
      %s16 = ssub.s32 %s11, 1
      %s17 = ssub.s32 %s11, 2
      %s18 = sadd.s32 %s11, 1
      %s20 = sadd.s32 %s19, 1
      %p23 = scmp.eq.s32.totalorder %s11, 1
      %p24 = scmp.ne.s32.totalorder %s19, %s21
      %p25 = scmp.eq.s32.totalorder %s11, 0
      %p26 = por %p24, %p25
      %p27 = scmp.ne.s32.totalorder %s19, %s21
      %p28 = scmp.eq.s32.totalorder %s16, 1
      %p29 = por %p27, %p28
      %p30 = scmp.ne.s32.totalorder %s21, %s22
      %p31 = scmp.eq.s32.totalorder %s16, 0
      %p32 = por %p30, %p31
      %p33 = scmp.ne.s32.totalorder %s21, %s22
      %p34 = scmp.eq.s32.totalorder %s17, 1
      %p35 = por %p33, %p34
      %p37 = scmp.ne.s32.totalorder %s22, %s36
      %p38 = scmp.eq.s32.totalorder %s17, 0
      %p39 = por %p37, %p38
      %s40 = ssub.s32 %s11, %s18
      %p41 = scmp.eq.s32.totalorder %s40, 0
      %s43 = sadd.s32 %s42, 1
      %s44 = scalar_select %p41, %s42, %s43
      %p47 = pneg %p41
      %p48 = scmp.eq.s32.totalorder %s11, 1
      %p49 = por %p47, %p48
      %p50 = scmp.ne.s32.totalorder %s42, %s45
      %p51 = scmp.eq.s32.totalorder %s11, 0
      %p52 = por %p50, %p51
      %p53 = scmp.ne.s32.totalorder %s42, %s45
      %p54 = scmp.eq.s32.totalorder %s16, 1
      %p55 = por %p53, %p54
      %p56 = scmp.ne.s32.totalorder %s45, %s46
      %p57 = scmp.eq.s32.totalorder %s16, 0
      %p58 = por %p56, %p57
      %p59 = scmp.ne.s32.totalorder %s45, %s46
      %p60 = scmp.eq.s32.totalorder %s17, 1
      %p61 = por %p59, %p60
      %p63 = scmp.ne.s32.totalorder %s46, %s62
      %p64 = scmp.eq.s32.totalorder %s17, 0
      %p65 = por %p63, %p64
      %p66 = scmp.le.s32.totalorder 1, %s11
      %p67 = scmp.lt.s32.totalorder %s11, 3
      %p68 = pnand %p66, %p67
      %p69 = pneg %p68
      // Predicated region
      $region9: #{tpu_custom_call.1} parent=5 // pred_check
        _
      $region10: #{tpu_custom_call.1} parent=5 // pred_check_branch
        %71 = sbr.rel (%p68) target = $region12
      $region11: #{tpu_custom_call.1} parent=5 // pred_region
        %s72 = ssub.s32 %s11, 1
        // Predicated region
        $region13: #{tpu_custom_call.1} parent=11 // pred_check
          %p73 = pneg %p32
        $region14: #{tpu_custom_call.1} parent=11 // pred_check_branch
          %75 = sbr.rel (%p73) target = $region16
        $region15: #{tpu_custom_call.1} parent=11 // pred_region
          %77 = vsyncadd [#allocation3], 0
          %s79 = sshll.u32 %s0, 4
          %s80 = int_to_ptr.hbm [resolvable:$true] %s79
          %s81 = sshll.u32 [#allocation2], 4
          %s82 = int_to_ptr.vmem [resolvable:$true] %s81
          %84 = dma.hbm_to_vmem [thread:$0]  %s80, 128, %s82, [#allocation3]
        $region16: #{tpu_custom_call.1} parent=11 // pred_fallthru
          _
      $region12: #{tpu_custom_call.1} parent=5 // pred_fallthru
        _
      %p85 = scmp.lt.s32.totalorder %s11, 2
      // Predicated region
      $region17: #{tpu_custom_call.1} parent=5 // pred_check
        %p86 = pneg %p85
      $region18: #{tpu_custom_call.1} parent=5 // pred_check_branch
        %88 = sbr.rel (%p86) target = $region20
      $region19: #{tpu_custom_call.1} parent=5 // pred_region
        _
      $region20: #{tpu_custom_call.1} parent=5 // pred_fallthru
        _
      %p89 = scmp.le.s32.totalorder 1, %s11
      %p90 = scmp.lt.s32.totalorder %s11, 3
      %p91 = pnand %p89, %p90
      %p92 = pneg %p91
      // Predicated region
      $region21: #{tpu_custom_call.1} parent=5 // pred_check
        _
      $region22: #{tpu_custom_call.1} parent=5 // pred_check_branch
        %94 = sbr.rel (%p91) target = $region24
      $region23: #{tpu_custom_call.1} parent=5 // pred_region
        %s95 = ssub.s32 %s11, 1
        // Predicated region
        $region25: #{tpu_custom_call.1} parent=23 // pred_check
          %p96 = pneg %p32
        $region26: #{tpu_custom_call.1} parent=23 // pred_check_branch
          %98 = sbr.rel (%p96) target = $region28
        $region27: #{tpu_custom_call.1} parent=23 // pred_region
          %100 = dma.done [#allocation3], 128
        $region28: #{tpu_custom_call.1} parent=23 // pred_fallthru
          _
        %p101 = pneg %p32
        %p102 = pneg %p29
        %p103 = pneg %p58
        %p104 = pneg %p55
        %s105 = sand.u32 %s45, 1
        %s106 = scalar_lea.sflag [#allocation4], %s105
        %s107 = sand.u32 %s45, 1
        %s108 = smul.addr %s107, 8
        %s109 = scalar_lea.vmem [#allocation5], %s108
        %v110 = vld [vmem:[#allocation2] sm:$0xff]
        %111 = vst [vmem:[%s109] sm:$0xff] %v110
        %s112 = sand.u32 %s45, 1
        %s113 = scalar_lea.sflag [#allocation4], %s112
        %s114 = sand.u32 %s45, 1
        %s115 = smul.addr %s114, 8
        %s116 = scalar_lea.vmem [#allocation5], %s115
        // Predicated region
        $region29: #{tpu_custom_call.1} parent=23 // pred_check
          %p117 = pneg %p55
        $region30: #{tpu_custom_call.1} parent=23 // pred_check_branch
          %119 = sbr.rel (%p117) target = $region32
        $region31: #{tpu_custom_call.1} parent=23 // pred_region
          %121 = vsyncadd %s113, 0
          %s122 = smul.addr %s16, 8
          %s123 = scalar_lea.hbm %s1, %s122
          %s125 = sshll.u32 %s116, 4
          %s126 = int_to_ptr.vmem [resolvable:$true] %s125
          %s127 = sshll.u32 %s123, 4
          %s128 = int_to_ptr.hbm [resolvable:$true] %s127
          %130 = dma.vmem_to_hbm [thread:$0]  %s126, 128, %s128, %s113
        $region32: #{tpu_custom_call.1} parent=23 // pred_fallthru
          _
      $region24: #{tpu_custom_call.1} parent=5 // pred_fallthru
        _
      %p131 = scmp.le.s32.totalorder 2, %s11
      // Predicated region
      $region33: #{tpu_custom_call.1} parent=5 // pred_check
        %p132 = pneg %p131
      $region34: #{tpu_custom_call.1} parent=5 // pred_check_branch
        %134 = sbr.rel (%p132) target = $region36
      $region35: #{tpu_custom_call.1} parent=5 // pred_region
        %s135 = ssub.s32 %s11, 2
        // Predicated region
        $region37: #{tpu_custom_call.1} parent=35 // pred_check
          %p136 = pneg %p61
        $region38: #{tpu_custom_call.1} parent=35 // pred_check_branch
          %138 = sbr.rel (%p136) target = $region40
        $region39: #{tpu_custom_call.1} parent=35 // pred_region
          %s139 = sand.u32 %s46, 1
          %s140 = scalar_lea.sflag [#allocation4], %s139
          %s141 = sand.u32 %s46, 1
          %s142 = smul.addr %s141, 8
          %s143 = scalar_lea.vmem [#allocation5], %s142
          %145 = dma.done %s140, 128
        $region40: #{tpu_custom_call.1} parent=35 // pred_fallthru
          _
      $region36: #{tpu_custom_call.1} parent=5 // pred_fallthru
        _
    $region6: #{tpu_custom_call.1} parent=1 // loop_footer
      %s15 = sadd.s32 1, %s11
    $region7: #{tpu_custom_call.1} parent=1 // loop_footer_branch
      %10 = sbr.rel target = $region3
    $region8: #{tpu_custom_call.1} parent=1 // loop_exit
      _
    %146 = vsyncpa [#allocation3], 1
    %s147 = scalar_lea.sflag [#allocation3], 1
    %148 = vsyncpa %s147, 1
    %149 = vsyncpa [#allocation4], 1
    %s150 = scalar_lea.sflag [#allocation4], 1
    %151 = vsyncpa %s150, 1

// kernel: textcnn_forward.3
$region0: #{textcnn_forward.3}
  #allocation0 [shape = 'u32[]', space=smem, size = 0x4, offset = 0x4, fixed_abs, tag = 'smem constant byte address 0x4 - core index']
  #allocation1 [shape = 'u32[72,128]{1,0:T(1,128)}', space=vmem, size = 0x9000, scoped, tag = 'internal scratch']
  %s0 = inlined_call_operand.vmem [shape: bf16[2,128], index: 0, kind: input, shape index: {}]
  %s1 = inlined_call_operand.vmem [shape: bf16[2,128], index: 1, kind: input, shape index: {}]
  %s2 = inlined_call_operand.hbm [shape: bf16[128,512], index: 2, kind: input, shape index: {}]
  %s3 = inlined_call_operand.hbm [shape: bf16[512,128], index: 3, kind: input, shape index: {}]
  %s4 = inlined_call_operand.vmem [shape: f32[1,128], index: 4, kind: input, shape index: {}]
  %s5 = inlined_call_operand.vmem [shape: f32[2,128], index: 5, kind: output, shape index: {}]
  %s6 = sld [smem:[#allocation0]]
  $region38: #{textcnn_forward.3} parent=0
    _
  %s8 = ssub.s32 1, %s6
  %s9 = scalar_select 0, %s8, %s6
  $region1: #{textcnn_forward.3} parent=0
    #allocation2 [shape = 'u8[131072]{0}', space=vmem, size = 0x20000, scoped, tag = 'input window, operand 2, single buffered']
    #allocation3 [shape = 's32[1]{0}', space=sflag, size = 0x4, scoped, tag = 'scoped memory for textcnn_forward.3']
    #allocation4 [shape = 'u8[131072]{0}', space=vmem, size = 0x20000, scoped, tag = 'input window, operand 3, single buffered']
    #allocation5 [shape = 's32[1]{0}', space=sflag, size = 0x4, scoped, tag = 'scoped memory for textcnn_forward.3']
    %10 = vsyncpa [#allocation3], 0
    %11 = vsyncpa [#allocation5], 0
    // Predicated region
    $region2: #{textcnn_forward.3} parent=1 // pred_check
      _
    $region3: #{textcnn_forward.3} parent=1 // pred_check_branch
      %13 = sbr.rel (0) target = $region5
    $region4: #{textcnn_forward.3} parent=1 // pred_region
      _
    $region5: #{textcnn_forward.3} parent=1 // pred_fallthru
      _
    // Predicated region
    $region6: #{textcnn_forward.3} parent=1 // pred_check
      _
    $region7: #{textcnn_forward.3} parent=1 // pred_check_branch
      %15 = sbr.rel (0) target = $region9
    $region8: #{textcnn_forward.3} parent=1 // pred_region
      _
    $region9: #{textcnn_forward.3} parent=1 // pred_fallthru
      _
    // Predicated region
    $region10: #{textcnn_forward.3} parent=1 // pred_check
      _
    $region11: #{textcnn_forward.3} parent=1 // pred_check_branch
      %17 = sbr.rel (0) target = $region13
    $region12: #{textcnn_forward.3} parent=1 // pred_region
      %19 = vsyncadd [#allocation3], 0
      %s20 = sshll.u32 %s2, 4
      %s21 = int_to_ptr.hbm [resolvable:$true] %s20
      %s22 = sshll.u32 [#allocation2], 4
      %s23 = int_to_ptr.vmem [resolvable:$true] %s22
      %28 = dma.hbm_to_vmem [thread:$0]  %s21, 4096, %s23, [#allocation3], 256, 256, 16
    $region13: #{textcnn_forward.3} parent=1 // pred_fallthru
      _
    // Predicated region
    $region14: #{textcnn_forward.3} parent=1 // pred_check
      _
    $region15: #{textcnn_forward.3} parent=1 // pred_check_branch
      %30 = sbr.rel (0) target = $region17
    $region16: #{textcnn_forward.3} parent=1 // pred_region
      %32 = vsyncadd [#allocation5], 0
      %s33 = sshll.u32 %s3, 4
      %s34 = int_to_ptr.hbm [resolvable:$true] %s33
      %s35 = sshll.u32 [#allocation4], 4
      %s36 = int_to_ptr.vmem [resolvable:$true] %s35
      %41 = dma.hbm_to_vmem [thread:$0]  %s34, 4096, %s36, [#allocation5], 64, 64, 4
    $region17: #{textcnn_forward.3} parent=1 // pred_fallthru
      _
    // Predicated region
    $region18: #{textcnn_forward.3} parent=1 // pred_check
      _
    $region19: #{textcnn_forward.3} parent=1 // pred_check_branch
      %43 = sbr.rel (0) target = $region21
    $region20: #{textcnn_forward.3} parent=1 // pred_region
      _
    $region21: #{textcnn_forward.3} parent=1 // pred_fallthru
      _
    // Predicated region
    $region22: #{textcnn_forward.3} parent=1 // pred_check
      _
    $region23: #{textcnn_forward.3} parent=1 // pred_check_branch
      %45 = sbr.rel (0) target = $region25
    $region24: #{textcnn_forward.3} parent=1 // pred_region
      %47 = dma.done [#allocation3], 4096
    $region25: #{textcnn_forward.3} parent=1 // pred_fallthru
      _
    // Predicated region
    $region26: #{textcnn_forward.3} parent=1 // pred_check
      _
    $region27: #{textcnn_forward.3} parent=1 // pred_check_branch
      %49 = sbr.rel (0) target = $region29
    $region28: #{textcnn_forward.3} parent=1 // pred_region
      %51 = dma.done [#allocation5], 4096
    $region29: #{textcnn_forward.3} parent=1 // pred_fallthru
      _
    %v52 = vld [vmem:[%s1] sm:$0x1]
    %v53 = vld [vmem:[#allocation2] sm:$0xff]
    %v54 = vld [vmem:[#allocation2 + $0x8] sm:$0xff]
    %v55 = vld [vmem:[#allocation2 + $0x10] sm:$0xff]
    %v56 = vld [vmem:[#allocation2 + $0x18] sm:$0xff]
    %v57 = vld [vmem:[#allocation2 + $0x20] sm:$0xff]
    %v58 = vld [vmem:[#allocation2 + $0x28] sm:$0xff]
    %v59 = vld [vmem:[#allocation2 + $0x30] sm:$0xff]
    %v60 = vld [vmem:[#allocation2 + $0x38] sm:$0xff]
    %v61 = vld [vmem:[#allocation2 + $0x40] sm:$0xff]
    %v62 = vld [vmem:[#allocation2 + $0x48] sm:$0xff]
    %v63 = vld [vmem:[#allocation2 + $0x50] sm:$0xff]
    %v64 = vld [vmem:[#allocation2 + $0x58] sm:$0xff]
    %v65 = vld [vmem:[#allocation2 + $0x60] sm:$0xff]
    %v66 = vld [vmem:[#allocation2 + $0x68] sm:$0xff]
    %v67 = vld [vmem:[#allocation2 + $0x70] sm:$0xff]
    %v68 = vld [vmem:[#allocation2 + $0x78] sm:$0xff]
    %v69 = vld [vmem:[#allocation2 + $0x80] sm:$0xff]
    %v70 = vld [vmem:[#allocation2 + $0x88] sm:$0xff]
    %v71 = vld [vmem:[#allocation2 + $0x90] sm:$0xff]
    %v72 = vld [vmem:[#allocation2 + $0x98] sm:$0xff]
    %v73 = vld [vmem:[#allocation2 + $0xa0] sm:$0xff]
    %v74 = vld [vmem:[#allocation2 + $0xa8] sm:$0xff]
    %v75 = vld [vmem:[#allocation2 + $0xb0] sm:$0xff]
    %v76 = vld [vmem:[#allocation2 + $0xb8] sm:$0xff]
    %v77 = vld [vmem:[#allocation2 + $0xc0] sm:$0xff]
    %v78 = vld [vmem:[#allocation2 + $0xc8] sm:$0xff]
    %v79 = vld [vmem:[#allocation2 + $0xd0] sm:$0xff]
    %v80 = vld [vmem:[#allocation2 + $0xd8] sm:$0xff]
    %v81 = vld [vmem:[#allocation2 + $0xe0] sm:$0xff]
    %v82 = vld [vmem:[#allocation2 + $0xe8] sm:$0xff]
    %v83 = vld [vmem:[#allocation2 + $0xf0] sm:$0xff]
    %v84 = vld [vmem:[#allocation2 + $0xf8] sm:$0xff]
    %v117 = vunpack.c.l.b16 %v53
    %v118 = vunpack.c.h.b16 %v53
    %v119 = vunpack.c.l.b16 %v54
    %v120 = vunpack.c.h.b16 %v54
    %v121 = vunpack.c.l.b16 %v55
    %v122 = vunpack.c.h.b16 %v55
    %v123 = vunpack.c.l.b16 %v56
    %v124 = vunpack.c.h.b16 %v56
    %v125 = vunpack.c.l.b16 %v57
    %v126 = vunpack.c.h.b16 %v57
    %v127 = vunpack.c.l.b16 %v58
    %v128 = vunpack.c.h.b16 %v58
    %v129 = vunpack.c.l.b16 %v59
    %v130 = vunpack.c.h.b16 %v59
    %v131 = vunpack.c.l.b16 %v60
    %v132 = vunpack.c.h.b16 %v60
    %v133 = vunpack.c.l.b16 %v61
    %v134 = vunpack.c.h.b16 %v61
    %v135 = vunpack.c.l.b16 %v62
    %v136 = vunpack.c.h.b16 %v62
    %v137 = vunpack.c.l.b16 %v63
    %v138 = vunpack.c.h.b16 %v63
    %v139 = vunpack.c.l.b16 %v64
    %v140 = vunpack.c.h.b16 %v64
    %v141 = vunpack.c.l.b16 %v65
    %v142 = vunpack.c.h.b16 %v65
    %v143 = vunpack.c.l.b16 %v66
    %v144 = vunpack.c.h.b16 %v66
    %v145 = vunpack.c.l.b16 %v67
    %v146 = vunpack.c.h.b16 %v67
    %v147 = vunpack.c.l.b16 %v68
    %v148 = vunpack.c.h.b16 %v68
    %v149 = vunpack.c.l.b16 %v69
    %v150 = vunpack.c.h.b16 %v69
    %v151 = vunpack.c.l.b16 %v70
    %v152 = vunpack.c.h.b16 %v70
    %v153 = vunpack.c.l.b16 %v71
    %v154 = vunpack.c.h.b16 %v71
    %v155 = vunpack.c.l.b16 %v72
    %v156 = vunpack.c.h.b16 %v72
    %v157 = vunpack.c.l.b16 %v73
    %v158 = vunpack.c.h.b16 %v73
    %v159 = vunpack.c.l.b16 %v74
    %v160 = vunpack.c.h.b16 %v74
    %v161 = vunpack.c.l.b16 %v75
    %v162 = vunpack.c.h.b16 %v75
    %v163 = vunpack.c.l.b16 %v76
    %v164 = vunpack.c.h.b16 %v76
    %v165 = vunpack.c.l.b16 %v77
    %v166 = vunpack.c.h.b16 %v77
    %v167 = vunpack.c.l.b16 %v78
    %v168 = vunpack.c.h.b16 %v78
    %v169 = vunpack.c.l.b16 %v79
    %v170 = vunpack.c.h.b16 %v79
    %v171 = vunpack.c.l.b16 %v80
    %v172 = vunpack.c.h.b16 %v80
    %v173 = vunpack.c.l.b16 %v81
    %v174 = vunpack.c.h.b16 %v81
    %v175 = vunpack.c.l.b16 %v82
    %v176 = vunpack.c.h.b16 %v82
    %v177 = vunpack.c.l.b16 %v83
    %v178 = vunpack.c.h.b16 %v83
    %v179 = vunpack.c.l.b16 %v84
    %v180 = vunpack.c.h.b16 %v84
    %v181 = vpack.c.b16 %v121, %v117
    %v182 = vpack.c.b16 %v122, %v118
    %v183 = vpack.c.b16 %v123, %v119
    %v184 = vpack.c.b16 %v124, %v120
    %v185 = vpack.c.b16 %v129, %v125
    %v186 = vpack.c.b16 %v130, %v126
    %v187 = vpack.c.b16 %v131, %v127
    %v188 = vpack.c.b16 %v132, %v128
    %v189 = vpack.c.b16 %v137, %v133
    %v190 = vpack.c.b16 %v138, %v134
    %v191 = vpack.c.b16 %v139, %v135
    %v192 = vpack.c.b16 %v140, %v136
    %v193 = vpack.c.b16 %v145, %v141
    %v194 = vpack.c.b16 %v146, %v142
    %v195 = vpack.c.b16 %v147, %v143
    %v196 = vpack.c.b16 %v148, %v144
    %v197 = vpack.c.b16 %v153, %v149
    %v198 = vpack.c.b16 %v154, %v150
    %v199 = vpack.c.b16 %v155, %v151
    %v200 = vpack.c.b16 %v156, %v152
    %v201 = vpack.c.b16 %v161, %v157
    %v202 = vpack.c.b16 %v162, %v158
    %v203 = vpack.c.b16 %v163, %v159
    %v204 = vpack.c.b16 %v164, %v160
    %v205 = vpack.c.b16 %v169, %v165
    %v206 = vpack.c.b16 %v170, %v166
    %v207 = vpack.c.b16 %v171, %v167
    %v208 = vpack.c.b16 %v172, %v168
    %v209 = vpack.c.b16 %v177, %v173
    %v210 = vpack.c.b16 %v178, %v174
    %v211 = vpack.c.b16 %v179, %v175
    %v212 = vpack.c.b16 %v180, %v176
    %245 = vmatpush.bf16.msra.mxu0 %v209
    %246 = vmatpush.bf16.msra.mxu0 %v205
    %247 = vmatpush.bf16.msra.mxu0 %v201
    %248 = vmatpush.bf16.msra.mxu0 %v197
    %249 = vmatpush.bf16.msra.mxu0 %v193
    %250 = vmatpush.bf16.msra.mxu0 %v189
    %251 = vmatpush.bf16.msra.mxu0 %v185
    %252 = vmatpush.bf16.msra.mxu0 %v181
    %253 = vmatmul.bf16.gmra.mxu0 %v52
    %v254 = vpop.f32.mrf.mxu0
    %v255 = vadd.f32 0.0, %v254
    %v256 = vpop.f32.mrf.mxu0
    %257 = vdwg.mxu0
    %258 = vmatpush.bf16.msra.mxu0 %v210
    %259 = vmatpush.bf16.msra.mxu0 %v206
    %260 = vmatpush.bf16.msra.mxu0 %v202
    %261 = vmatpush.bf16.msra.mxu0 %v198
    %262 = vmatpush.bf16.msra.mxu0 %v194
    %263 = vmatpush.bf16.msra.mxu0 %v190
    %264 = vmatpush.bf16.msra.mxu0 %v186
    %265 = vmatpush.bf16.msra.mxu0 %v182
    %266 = vmatmul.bf16.gmra.mxu0 %v52
    %v267 = vpop.f32.mrf.mxu0
    %v268 = vadd.f32 0.0, %v267
    %v269 = vpop.f32.mrf.mxu0
    %270 = vdwg.mxu0
    %271 = vmatpush.bf16.msra.mxu0 %v211
    %272 = vmatpush.bf16.msra.mxu0 %v207
    %273 = vmatpush.bf16.msra.mxu0 %v203
    %274 = vmatpush.bf16.msra.mxu0 %v199
    %275 = vmatpush.bf16.msra.mxu0 %v195
    %276 = vmatpush.bf16.msra.mxu0 %v191
    %277 = vmatpush.bf16.msra.mxu0 %v187
    %278 = vmatpush.bf16.msra.mxu0 %v183
    %279 = vmatmul.bf16.gmra.mxu0 %v52
    %v280 = vpop.f32.mrf.mxu0
    %v281 = vadd.f32 0.0, %v280
    %v282 = vpop.f32.mrf.mxu0
    %283 = vdwg.mxu0
    %284 = vmatpush.bf16.msra.mxu0 %v212
    %285 = vmatpush.bf16.msra.mxu0 %v208
    %286 = vmatpush.bf16.msra.mxu0 %v204
    %287 = vmatpush.bf16.msra.mxu0 %v200
    %288 = vmatpush.bf16.msra.mxu0 %v196
    %289 = vmatpush.bf16.msra.mxu0 %v192
    %290 = vmatpush.bf16.msra.mxu0 %v188
    %291 = vmatpush.bf16.msra.mxu0 %v184
    %292 = vmatmul.bf16.gmra.mxu0 %v52
    %v293 = vpop.f32.mrf.mxu0
    %v294 = vadd.f32 0.0, %v293
    %v295 = vpop.f32.mrf.mxu0
    %296 = vdwg.mxu0
    %v297 = vld [vmem:[%s0] sm:$0x1]
    %v298 = vunpack.c.l.bf16 %v297
    %v299 = vmul.f32 %v298, %v255
    %v300 = vmul.f32 %v298, %v268
    %v301 = vmul.f32 %v298, %v281
    %v302 = vmul.f32 %v298, %v294
    %v303 = vpack.c.bf16 %v299, %v299
    %v304 = vpack.c.bf16 %v300, %v300
    %v305 = vpack.c.bf16 %v301, %v301
    %v306 = vpack.c.bf16 %v302, %v302
    %v307 = vld [vmem:[#allocation4] sm:$0xf]
    %v308 = vld [vmem:[#allocation4 + $0x4] sm:$0xf]
    %v309 = vld [vmem:[#allocation4 + $0x8] sm:$0xf]
    %v310 = vld [vmem:[#allocation4 + $0xc] sm:$0xf]
    %v311 = vld [vmem:[#allocation4 + $0x10] sm:$0xf]
    %v312 = vld [vmem:[#allocation4 + $0x14] sm:$0xf]
    %v313 = vld [vmem:[#allocation4 + $0x18] sm:$0xf]
    %v314 = vld [vmem:[#allocation4 + $0x1c] sm:$0xf]
    %v315 = vld [vmem:[#allocation4 + $0x20] sm:$0xf]
    %v316 = vld [vmem:[#allocation4 + $0x24] sm:$0xf]
    %v317 = vld [vmem:[#allocation4 + $0x28] sm:$0xf]
    %v318 = vld [vmem:[#allocation4 + $0x2c] sm:$0xf]
    %v319 = vld [vmem:[#allocation4 + $0x30] sm:$0xf]
    %v320 = vld [vmem:[#allocation4 + $0x34] sm:$0xf]
    %v321 = vld [vmem:[#allocation4 + $0x38] sm:$0xf]
    %v322 = vld [vmem:[#allocation4 + $0x3c] sm:$0xf]
    %v323 = vld [vmem:[#allocation4 + $0x40] sm:$0xf]
    %v324 = vld [vmem:[#allocation4 + $0x44] sm:$0xf]
    %v325 = vld [vmem:[#allocation4 + $0x48] sm:$0xf]
    %v326 = vld [vmem:[#allocation4 + $0x4c] sm:$0xf]
    %v327 = vld [vmem:[#allocation4 + $0x50] sm:$0xf]
    %v328 = vld [vmem:[#allocation4 + $0x54] sm:$0xf]
    %v329 = vld [vmem:[#allocation4 + $0x58] sm:$0xf]
    %v330 = vld [vmem:[#allocation4 + $0x5c] sm:$0xf]
    %v331 = vld [vmem:[#allocation4 + $0x60] sm:$0xf]
    %v332 = vld [vmem:[#allocation4 + $0x64] sm:$0xf]
    %v333 = vld [vmem:[#allocation4 + $0x68] sm:$0xf]
    %v334 = vld [vmem:[#allocation4 + $0x6c] sm:$0xf]
    %v335 = vld [vmem:[#allocation4 + $0x70] sm:$0xf]
    %v336 = vld [vmem:[#allocation4 + $0x74] sm:$0xf]
    %v337 = vld [vmem:[#allocation4 + $0x78] sm:$0xf]
    %v338 = vld [vmem:[#allocation4 + $0x7c] sm:$0xf]
    %v339 = vld [vmem:[#allocation4 + $0x80] sm:$0xf]
    %v340 = vld [vmem:[#allocation4 + $0x84] sm:$0xf]
    %v341 = vld [vmem:[#allocation4 + $0x88] sm:$0xf]
    %v342 = vld [vmem:[#allocation4 + $0x8c] sm:$0xf]
    %v343 = vld [vmem:[#allocation4 + $0x90] sm:$0xf]
    %v344 = vld [vmem:[#allocation4 + $0x94] sm:$0xf]
    %v345 = vld [vmem:[#allocation4 + $0x98] sm:$0xf]
    %v346 = vld [vmem:[#allocation4 + $0x9c] sm:$0xf]
    %v347 = vld [vmem:[#allocation4 + $0xa0] sm:$0xf]
    %v348 = vld [vmem:[#allocation4 + $0xa4] sm:$0xf]
    %v349 = vld [vmem:[#allocation4 + $0xa8] sm:$0xf]
    %v350 = vld [vmem:[#allocation4 + $0xac] sm:$0xf]
    %v351 = vld [vmem:[#allocation4 + $0xb0] sm:$0xf]
    %v352 = vld [vmem:[#allocation4 + $0xb4] sm:$0xf]
    %v353 = vld [vmem:[#allocation4 + $0xb8] sm:$0xf]
    %v354 = vld [vmem:[#allocation4 + $0xbc] sm:$0xf]
    %v355 = vld [vmem:[#allocation4 + $0xc0] sm:$0xf]
    %v356 = vld [vmem:[#allocation4 + $0xc4] sm:$0xf]
    %v357 = vld [vmem:[#allocation4 + $0xc8] sm:$0xf]
    %v358 = vld [vmem:[#allocation4 + $0xcc] sm:$0xf]
    %v359 = vld [vmem:[#allocation4 + $0xd0] sm:$0xf]
    %v360 = vld [vmem:[#allocation4 + $0xd4] sm:$0xf]
    %v361 = vld [vmem:[#allocation4 + $0xd8] sm:$0xf]
    %v362 = vld [vmem:[#allocation4 + $0xdc] sm:$0xf]
    %v363 = vld [vmem:[#allocation4 + $0xe0] sm:$0xf]
    %v364 = vld [vmem:[#allocation4 + $0xe4] sm:$0xf]
    %v365 = vld [vmem:[#allocation4 + $0xe8] sm:$0xf]
    %v366 = vld [vmem:[#allocation4 + $0xec] sm:$0xf]
    %v367 = vld [vmem:[#allocation4 + $0xf0] sm:$0xf]
    %v368 = vld [vmem:[#allocation4 + $0xf4] sm:$0xf]
    %v369 = vld [vmem:[#allocation4 + $0xf8] sm:$0xf]
    %v370 = vld [vmem:[#allocation4 + $0xfc] sm:$0xf]
    %v371 = vld [vmem:[%s4] sm:$0x1]
    %v373 = vperm.slane %v371, 0
    %v439 = vunpack.c.l.b16 %v307
    %v440 = vunpack.c.l.b16 %v308
    %v441 = vunpack.c.l.b16 %v309
    %v442 = vunpack.c.l.b16 %v310
    %v443 = vunpack.c.l.b16 %v311
    %v444 = vunpack.c.l.b16 %v312
    %v445 = vunpack.c.l.b16 %v313
    %v446 = vunpack.c.l.b16 %v314
    %v447 = vunpack.c.l.b16 %v315
    %v448 = vunpack.c.l.b16 %v316
    %v449 = vunpack.c.l.b16 %v317
    %v450 = vunpack.c.l.b16 %v318
    %v451 = vunpack.c.l.b16 %v319
    %v452 = vunpack.c.l.b16 %v320
    %v453 = vunpack.c.l.b16 %v321
    %v454 = vunpack.c.l.b16 %v322
    %v455 = vunpack.c.l.b16 %v323
    %v456 = vunpack.c.l.b16 %v324
    %v457 = vunpack.c.l.b16 %v325
    %v458 = vunpack.c.l.b16 %v326
    %v459 = vunpack.c.l.b16 %v327
    %v460 = vunpack.c.l.b16 %v328
    %v461 = vunpack.c.l.b16 %v329
    %v462 = vunpack.c.l.b16 %v330
    %v463 = vunpack.c.l.b16 %v331
    %v464 = vunpack.c.l.b16 %v332
    %v465 = vunpack.c.l.b16 %v333
    %v466 = vunpack.c.l.b16 %v334
    %v467 = vunpack.c.l.b16 %v335
    %v468 = vunpack.c.l.b16 %v336
    %v469 = vunpack.c.l.b16 %v337
    %v470 = vunpack.c.l.b16 %v338
    %v471 = vunpack.c.l.b16 %v339
    %v472 = vunpack.c.l.b16 %v340
    %v473 = vunpack.c.l.b16 %v341
    %v474 = vunpack.c.l.b16 %v342
    %v475 = vunpack.c.l.b16 %v343
    %v476 = vunpack.c.l.b16 %v344
    %v477 = vunpack.c.l.b16 %v345
    %v478 = vunpack.c.l.b16 %v346
    %v479 = vunpack.c.l.b16 %v347
    %v480 = vunpack.c.l.b16 %v348
    %v481 = vunpack.c.l.b16 %v349
    %v482 = vunpack.c.l.b16 %v350
    %v483 = vunpack.c.l.b16 %v351
    %v484 = vunpack.c.l.b16 %v352
    %v485 = vunpack.c.l.b16 %v353
    %v486 = vunpack.c.l.b16 %v354
    %v487 = vunpack.c.l.b16 %v355
    %v488 = vunpack.c.l.b16 %v356
    %v489 = vunpack.c.l.b16 %v357
    %v490 = vunpack.c.l.b16 %v358
    %v491 = vunpack.c.l.b16 %v359
    %v492 = vunpack.c.l.b16 %v360
    %v493 = vunpack.c.l.b16 %v361
    %v494 = vunpack.c.l.b16 %v362
    %v495 = vunpack.c.l.b16 %v363
    %v496 = vunpack.c.l.b16 %v364
    %v497 = vunpack.c.l.b16 %v365
    %v498 = vunpack.c.l.b16 %v366
    %v499 = vunpack.c.l.b16 %v367
    %v500 = vunpack.c.l.b16 %v368
    %v501 = vunpack.c.l.b16 %v369
    %v502 = vunpack.c.l.b16 %v370
    %v503 = vpack.c.b16 %v440, %v439
    %v504 = vpack.c.b16 %v442, %v441
    %v505 = vpack.c.b16 %v444, %v443
    %v506 = vpack.c.b16 %v446, %v445
    %v507 = vpack.c.b16 %v448, %v447
    %v508 = vpack.c.b16 %v450, %v449
    %v509 = vpack.c.b16 %v452, %v451
    %v510 = vpack.c.b16 %v454, %v453
    %v511 = vpack.c.b16 %v456, %v455
    %v512 = vpack.c.b16 %v458, %v457
    %v513 = vpack.c.b16 %v460, %v459
    %v514 = vpack.c.b16 %v462, %v461
    %v515 = vpack.c.b16 %v464, %v463
    %v516 = vpack.c.b16 %v466, %v465
    %v517 = vpack.c.b16 %v468, %v467
    %v518 = vpack.c.b16 %v470, %v469
    %v519 = vpack.c.b16 %v472, %v471
    %v520 = vpack.c.b16 %v474, %v473
    %v521 = vpack.c.b16 %v476, %v475
    %v522 = vpack.c.b16 %v478, %v477
    %v523 = vpack.c.b16 %v480, %v479
    %v524 = vpack.c.b16 %v482, %v481
    %v525 = vpack.c.b16 %v484, %v483
    %v526 = vpack.c.b16 %v486, %v485
    %v527 = vpack.c.b16 %v488, %v487
    %v528 = vpack.c.b16 %v490, %v489
    %v529 = vpack.c.b16 %v492, %v491
    %v530 = vpack.c.b16 %v494, %v493
    %v531 = vpack.c.b16 %v496, %v495
    %v532 = vpack.c.b16 %v498, %v497
    %v533 = vpack.c.b16 %v500, %v499
    %v534 = vpack.c.b16 %v502, %v501
    %567 = vmatpush.bf16.msra.mxu0 %v510
    %568 = vmatpush.bf16.msra.mxu0 %v509
    %569 = vmatpush.bf16.msra.mxu0 %v508
    %570 = vmatpush.bf16.msra.mxu0 %v507
    %571 = vmatpush.bf16.msra.mxu0 %v506
    %572 = vmatpush.bf16.msra.mxu0 %v505
    %573 = vmatpush.bf16.msra.mxu0 %v504
    %574 = vmatpush.bf16.msra.mxu0 %v503
    %575 = vmatmul.bf16.gmra.mxu0 %v303
    %v576 = vpop.f32.mrf.mxu0
    %v577 = vadd.f32 %v373, %v576
    %v578 = vpop.f32.mrf.mxu0
    %579 = vdwg.mxu0
    %580 = vmatpush.bf16.msra.mxu0 %v518
    %581 = vmatpush.bf16.msra.mxu0 %v517
    %582 = vmatpush.bf16.msra.mxu0 %v516
    %583 = vmatpush.bf16.msra.mxu0 %v515
    %584 = vmatpush.bf16.msra.mxu0 %v514
    %585 = vmatpush.bf16.msra.mxu0 %v513
    %586 = vmatpush.bf16.msra.mxu0 %v512
    %587 = vmatpush.bf16.msra.mxu0 %v511
    %588 = vmatmul.bf16.gmra.mxu0 %v304
    %v589 = vpop.f32.mrf.mxu0
    %v590 = vadd.f32 %v577, %v589
    %v591 = vpop.f32.mrf.mxu0
    %592 = vdwg.mxu0
    %593 = vmatpush.bf16.msra.mxu0 %v526
    %594 = vmatpush.bf16.msra.mxu0 %v525
    %595 = vmatpush.bf16.msra.mxu0 %v524
    %596 = vmatpush.bf16.msra.mxu0 %v523
    %597 = vmatpush.bf16.msra.mxu0 %v522
    %598 = vmatpush.bf16.msra.mxu0 %v521
    %599 = vmatpush.bf16.msra.mxu0 %v520
    %600 = vmatpush.bf16.msra.mxu0 %v519
    %601 = vmatmul.bf16.gmra.mxu0 %v305
    %v602 = vpop.f32.mrf.mxu0
    %v603 = vadd.f32 %v590, %v602
    %v604 = vpop.f32.mrf.mxu0
    %605 = vdwg.mxu0
    %606 = vmatpush.bf16.msra.mxu0 %v534
    %607 = vmatpush.bf16.msra.mxu0 %v533
    %608 = vmatpush.bf16.msra.mxu0 %v532
    %609 = vmatpush.bf16.msra.mxu0 %v531
    %610 = vmatpush.bf16.msra.mxu0 %v530
    %611 = vmatpush.bf16.msra.mxu0 %v529
    %612 = vmatpush.bf16.msra.mxu0 %v528
    %613 = vmatpush.bf16.msra.mxu0 %v527
    %614 = vmatmul.bf16.gmra.mxu0 %v306
    %v615 = vpop.f32.mrf.mxu0
    %v616 = vadd.f32 %v603, %v615
    %v617 = vpop.f32.mrf.mxu0
    %618 = vdwg.mxu0
    %619 = vst [vmem:[%s5] sm:$0x3] %v616
    // Predicated region
    $region30: #{textcnn_forward.3} parent=1 // pred_check
      _
    $region31: #{textcnn_forward.3} parent=1 // pred_check_branch
      %621 = sbr.rel (0) target = $region33
    $region32: #{textcnn_forward.3} parent=1 // pred_region
      _
    $region33: #{textcnn_forward.3} parent=1 // pred_fallthru
      _
    // Predicated region
    $region34: #{textcnn_forward.3} parent=1 // pred_check
      _
    $region35: #{textcnn_forward.3} parent=1 // pred_check_branch
      %623 = sbr.rel (0) target = $region37
    $region36: #{textcnn_forward.3} parent=1 // pred_region
      _
    $region37: #{textcnn_forward.3} parent=1 // pred_fallthru
      _
    %624 = vsyncpa [#allocation3], 1
    %625 = vsyncpa [#allocation5], 1

// kernel: textcnn_forward.2
$region0: #{textcnn_forward.2}
  #allocation0 [shape = 'u32[]', space=smem, size = 0x4, offset = 0x4, fixed_abs, tag = 'smem constant byte address 0x4 - core index']
  #allocation1 [shape = 'u32[72,128]{1,0:T(1,128)}', space=vmem, size = 0x9000, scoped, tag = 'internal scratch']
  %s0 = inlined_call_operand.vmem [shape: bf16[32,128], index: 0, kind: input, shape index: {}]
  %s1 = inlined_call_operand.hbm [shape: bf16[640,128], index: 1, kind: input, shape index: {}]
  %s2 = inlined_call_operand.vmem [shape: f32[1,128], index: 2, kind: input, shape index: {}]
  %s3 = inlined_call_operand.vmem [shape: f32[8,128], index: 3, kind: input, shape index: {}]
  %s4 = inlined_call_operand.vmem [shape: bf16[4,128], index: 4, kind: output, shape index: {}]
  %s5 = sld [smem:[#allocation0]]
  $region30: #{textcnn_forward.2} parent=0
    _
  %s7 = ssub.s32 1, %s5
  %s8 = scalar_select 0, %s7, %s5
  $region1: #{textcnn_forward.2} parent=0
    #allocation2 [shape = 'u8[163840]{0}', space=vmem, size = 0x28000, scoped, tag = 'input window, operand 1, single buffered']
    #allocation3 [shape = 's32[1]{0}', space=sflag, size = 0x4, scoped, tag = 'scoped memory for textcnn_forward.2']
    %9 = vsyncpa [#allocation3], 0
    // Predicated region
    $region2: #{textcnn_forward.2} parent=1 // pred_check
      _
    $region3: #{textcnn_forward.2} parent=1 // pred_check_branch
      %11 = sbr.rel (0) target = $region5
    $region4: #{textcnn_forward.2} parent=1 // pred_region
      _
    $region5: #{textcnn_forward.2} parent=1 // pred_fallthru
      _
    // Predicated region
    $region6: #{textcnn_forward.2} parent=1 // pred_check
      _
    $region7: #{textcnn_forward.2} parent=1 // pred_check_branch
      %13 = sbr.rel (0) target = $region9
    $region8: #{textcnn_forward.2} parent=1 // pred_region
      %15 = vsyncadd [#allocation3], 0
      %s16 = sshll.u32 %s1, 4
      %s17 = int_to_ptr.hbm [resolvable:$true] %s16
      %s18 = sshll.u32 [#allocation2], 4
      %s19 = int_to_ptr.vmem [resolvable:$true] %s18
      %24 = dma.hbm_to_vmem [thread:$0]  %s17, 5120, %s19, [#allocation3], 64, 64, 4
    $region9: #{textcnn_forward.2} parent=1 // pred_fallthru
      _
    // Predicated region
    $region10: #{textcnn_forward.2} parent=1 // pred_check
      _
    $region11: #{textcnn_forward.2} parent=1 // pred_check_branch
      %26 = sbr.rel (0) target = $region13
    $region12: #{textcnn_forward.2} parent=1 // pred_region
      _
    $region13: #{textcnn_forward.2} parent=1 // pred_fallthru
      _
    // Predicated region
    $region14: #{textcnn_forward.2} parent=1 // pred_check
      _
    $region15: #{textcnn_forward.2} parent=1 // pred_check_branch
      %28 = sbr.rel (0) target = $region17
    $region16: #{textcnn_forward.2} parent=1 // pred_region
      _
    $region17: #{textcnn_forward.2} parent=1 // pred_fallthru
      _
    // Predicated region
    $region18: #{textcnn_forward.2} parent=1 // pred_check
      _
    $region19: #{textcnn_forward.2} parent=1 // pred_check_branch
      %30 = sbr.rel (0) target = $region21
    $region20: #{textcnn_forward.2} parent=1 // pred_region
      %32 = dma.done [#allocation3], 5120
    $region21: #{textcnn_forward.2} parent=1 // pred_fallthru
      _
    %v33 = vld [vmem:[%s0] sm:$0xf]
    %v34 = vld [vmem:[%s0 + $0x4] sm:$0xf]
    %v35 = vld [vmem:[%s0 + $0x8] sm:$0xf]
    %v36 = vld [vmem:[%s0 + $0xc] sm:$0xf]
    %v37 = vunpack.c.l.bf16 %v33
    %v38 = vunpack.c.l.bf16 %v34
    %v39 = vunpack.c.l.bf16 %v35
    %v40 = vunpack.c.l.bf16 %v36
    %v41 = vrot.slane %v37, 1
    %v42 = vrot.slane %v38, 1
    %v43 = vrot.slane %v39, 1
    %v44 = vrot.slane %v40, 1
    %v45 = vlaneseq
    %v46 = vshrl.u32 %v45, 7
    %vm47 = vcmp.lt.s32.totalorder %v46, 7
    %v48 = vsel %vm47, %v43, %v44
    %v49 = vsel %vm47, %v42, %v43
    %v50 = vsel %vm47, %v41, %v42
    %v51 = vsel %vm47, %v44, %v41
    %v52 = vpack.c.bf16 %v50, %v50
    %v53 = vpack.c.bf16 %v49, %v49
    %v54 = vpack.c.bf16 %v48, %v48
    %v55 = vpack.c.bf16 %v51, %v51
    %v56 = vrot.slane %v37, 2
    %v57 = vrot.slane %v38, 2
    %v58 = vrot.slane %v39, 2
    %v59 = vrot.slane %v40, 2
    %vm60 = vcmp.lt.s32.totalorder %v46, 6
    %v61 = vsel %vm60, %v58, %v59
    %v62 = vsel %vm60, %v57, %v58
    %v63 = vsel %vm60, %v56, %v57
    %v64 = vsel %vm60, %v59, %v56
    %v65 = vpack.c.bf16 %v63, %v63
    %v66 = vpack.c.bf16 %v62, %v62
    %v67 = vpack.c.bf16 %v61, %v61
    %v68 = vpack.c.bf16 %v64, %v64
    %v69 = vrot.slane %v37, 3
    %v70 = vrot.slane %v38, 3
    %v71 = vrot.slane %v39, 3
    %v72 = vrot.slane %v40, 3
    %vm73 = vcmp.lt.s32.totalorder %v46, 5
    %v74 = vsel %vm73, %v71, %v72
    %v75 = vsel %vm73, %v70, %v71
    %v76 = vsel %vm73, %v69, %v70
    %v77 = vsel %vm73, %v72, %v69
    %v78 = vpack.c.bf16 %v76, %v76
    %v79 = vpack.c.bf16 %v75, %v75
    %v80 = vpack.c.bf16 %v74, %v74
    %v81 = vpack.c.bf16 %v77, %v77
    %v82 = vrot.slane %v37, 4
    %v83 = vrot.slane %v38, 4
    %v84 = vrot.slane %v39, 4
    %v85 = vrot.slane %v40, 4
    %vm86 = vcmp.lt.s32.totalorder %v46, 4
    %v87 = vsel %vm86, %v84, %v85
    %v88 = vsel %vm86, %v83, %v84
    %v89 = vsel %vm86, %v82, %v83
    %v90 = vsel %vm86, %v85, %v82
    %v91 = vpack.c.bf16 %v89, %v89
    %v92 = vpack.c.bf16 %v88, %v88
    %v93 = vpack.c.bf16 %v87, %v87
    %v94 = vpack.c.bf16 %v90, %v90
    %v99 = vunpack.c.l.b16 %v33
    %v100 = vunpack.c.l.b16 %v34
    %v101 = vunpack.c.l.b16 %v35
    %v102 = vunpack.c.l.b16 %v36
    %v103 = vpack.c.b16 %v100, %v99
    %v104 = vpack.c.b16 %v102, %v101
    %v111 = vunpack.c.l.b16 %v52
    %v112 = vunpack.c.l.b16 %v53
    %v113 = vunpack.c.l.b16 %v54
    %v114 = vunpack.c.l.b16 %v55
    %v115 = vpack.c.b16 %v112, %v111
    %v116 = vpack.c.b16 %v114, %v113
    %v123 = vunpack.c.l.b16 %v65
    %v124 = vunpack.c.l.b16 %v66
    %v125 = vunpack.c.l.b16 %v67
    %v126 = vunpack.c.l.b16 %v68
    %v127 = vpack.c.b16 %v124, %v123
    %v128 = vpack.c.b16 %v126, %v125
    %v135 = vunpack.c.l.b16 %v78
    %v136 = vunpack.c.l.b16 %v79
    %v137 = vunpack.c.l.b16 %v80
    %v138 = vunpack.c.l.b16 %v81
    %v139 = vpack.c.b16 %v136, %v135
    %v140 = vpack.c.b16 %v138, %v137
    %v147 = vunpack.c.l.b16 %v91
    %v148 = vunpack.c.l.b16 %v92
    %v149 = vunpack.c.l.b16 %v93
    %v150 = vunpack.c.l.b16 %v94
    %v151 = vpack.c.b16 %v148, %v147
    %v152 = vpack.c.b16 %v150, %v149
    %v155 = vld [vmem:[#allocation2] sm:$0xf]
    %v156 = vld [vmem:[#allocation2 + $0x4] sm:$0xf]
    %v157 = vld [vmem:[#allocation2 + $0x8] sm:$0xf]
    %v158 = vld [vmem:[#allocation2 + $0xc] sm:$0xf]
    %v159 = vld [vmem:[#allocation2 + $0x10] sm:$0xf]
    %v160 = vld [vmem:[#allocation2 + $0x14] sm:$0xf]
    %v161 = vld [vmem:[#allocation2 + $0x18] sm:$0xf]
    %v162 = vld [vmem:[#allocation2 + $0x1c] sm:$0xf]
    %v163 = vld [vmem:[#allocation2 + $0x20] sm:$0xf]
    %v164 = vld [vmem:[#allocation2 + $0x24] sm:$0xf]
    %v165 = vld [vmem:[#allocation2 + $0x28] sm:$0xf]
    %v166 = vld [vmem:[#allocation2 + $0x2c] sm:$0xf]
    %v167 = vld [vmem:[#allocation2 + $0x30] sm:$0xf]
    %v168 = vld [vmem:[#allocation2 + $0x34] sm:$0xf]
    %v169 = vld [vmem:[#allocation2 + $0x38] sm:$0xf]
    %v170 = vld [vmem:[#allocation2 + $0x3c] sm:$0xf]
    %v171 = vld [vmem:[#allocation2 + $0x40] sm:$0xf]
    %v172 = vld [vmem:[#allocation2 + $0x44] sm:$0xf]
    %v173 = vld [vmem:[#allocation2 + $0x48] sm:$0xf]
    %v174 = vld [vmem:[#allocation2 + $0x4c] sm:$0xf]
    %v175 = vld [vmem:[#allocation2 + $0x50] sm:$0xf]
    %v176 = vld [vmem:[#allocation2 + $0x54] sm:$0xf]
    %v177 = vld [vmem:[#allocation2 + $0x58] sm:$0xf]
    %v178 = vld [vmem:[#allocation2 + $0x5c] sm:$0xf]
    %v179 = vld [vmem:[#allocation2 + $0x60] sm:$0xf]
    %v180 = vld [vmem:[#allocation2 + $0x64] sm:$0xf]
    %v181 = vld [vmem:[#allocation2 + $0x68] sm:$0xf]
    %v182 = vld [vmem:[#allocation2 + $0x6c] sm:$0xf]
    %v183 = vld [vmem:[#allocation2 + $0x70] sm:$0xf]
    %v184 = vld [vmem:[#allocation2 + $0x74] sm:$0xf]
    %v185 = vld [vmem:[#allocation2 + $0x78] sm:$0xf]
    %v186 = vld [vmem:[#allocation2 + $0x7c] sm:$0xf]
    %v187 = vld [vmem:[#allocation2 + $0x80] sm:$0xf]
    %v188 = vld [vmem:[#allocation2 + $0x84] sm:$0xf]
    %v189 = vld [vmem:[#allocation2 + $0x88] sm:$0xf]
    %v190 = vld [vmem:[#allocation2 + $0x8c] sm:$0xf]
    %v191 = vld [vmem:[#allocation2 + $0x90] sm:$0xf]
    %v192 = vld [vmem:[#allocation2 + $0x94] sm:$0xf]
    %v193 = vld [vmem:[#allocation2 + $0x98] sm:$0xf]
    %v194 = vld [vmem:[#allocation2 + $0x9c] sm:$0xf]
    %v195 = vld [vmem:[#allocation2 + $0xa0] sm:$0xf]
    %v196 = vld [vmem:[#allocation2 + $0xa4] sm:$0xf]
    %v197 = vld [vmem:[#allocation2 + $0xa8] sm:$0xf]
    %v198 = vld [vmem:[#allocation2 + $0xac] sm:$0xf]
    %v199 = vld [vmem:[#allocation2 + $0xb0] sm:$0xf]
    %v200 = vld [vmem:[#allocation2 + $0xb4] sm:$0xf]
    %v201 = vld [vmem:[#allocation2 + $0xb8] sm:$0xf]
    %v202 = vld [vmem:[#allocation2 + $0xbc] sm:$0xf]
    %v203 = vld [vmem:[#allocation2 + $0xc0] sm:$0xf]
    %v204 = vld [vmem:[#allocation2 + $0xc4] sm:$0xf]
    %v205 = vld [vmem:[#allocation2 + $0xc8] sm:$0xf]
    %v206 = vld [vmem:[#allocation2 + $0xcc] sm:$0xf]
    %v207 = vld [vmem:[#allocation2 + $0xd0] sm:$0xf]
    %v208 = vld [vmem:[#allocation2 + $0xd4] sm:$0xf]
    %v209 = vld [vmem:[#allocation2 + $0xd8] sm:$0xf]
    %v210 = vld [vmem:[#allocation2 + $0xdc] sm:$0xf]
    %v211 = vld [vmem:[#allocation2 + $0xe0] sm:$0xf]
    %v212 = vld [vmem:[#allocation2 + $0xe4] sm:$0xf]
    %v213 = vld [vmem:[#allocation2 + $0xe8] sm:$0xf]
    %v214 = vld [vmem:[#allocation2 + $0xec] sm:$0xf]
    %v215 = vld [vmem:[#allocation2 + $0xf0] sm:$0xf]
    %v216 = vld [vmem:[#allocation2 + $0xf4] sm:$0xf]
    %v217 = vld [vmem:[#allocation2 + $0xf8] sm:$0xf]
    %v218 = vld [vmem:[#allocation2 + $0xfc] sm:$0xf]
    %v219 = vld [vmem:[#allocation2 + $0x100] sm:$0xf]
    %v220 = vld [vmem:[#allocation2 + $0x104] sm:$0xf]
    %v221 = vld [vmem:[#allocation2 + $0x108] sm:$0xf]
    %v222 = vld [vmem:[#allocation2 + $0x10c] sm:$0xf]
    %v223 = vld [vmem:[#allocation2 + $0x110] sm:$0xf]
    %v224 = vld [vmem:[#allocation2 + $0x114] sm:$0xf]
    %v225 = vld [vmem:[#allocation2 + $0x118] sm:$0xf]
    %v226 = vld [vmem:[#allocation2 + $0x11c] sm:$0xf]
    %v227 = vld [vmem:[#allocation2 + $0x120] sm:$0xf]
    %v228 = vld [vmem:[#allocation2 + $0x124] sm:$0xf]
    %v229 = vld [vmem:[#allocation2 + $0x128] sm:$0xf]
    %v230 = vld [vmem:[#allocation2 + $0x12c] sm:$0xf]
    %v231 = vld [vmem:[#allocation2 + $0x130] sm:$0xf]
    %v232 = vld [vmem:[#allocation2 + $0x134] sm:$0xf]
    %v233 = vld [vmem:[#allocation2 + $0x138] sm:$0xf]
    %v234 = vld [vmem:[#allocation2 + $0x13c] sm:$0xf]
    %v235 = vld [vmem:[%s2] sm:$0x1]
    %v237 = vperm.slane %v235, 0
    %v319 = vunpack.c.l.b16 %v155
    %v320 = vunpack.c.l.b16 %v156
    %v321 = vunpack.c.l.b16 %v157
    %v322 = vunpack.c.l.b16 %v158
    %v323 = vunpack.c.l.b16 %v159
    %v324 = vunpack.c.l.b16 %v160
    %v325 = vunpack.c.l.b16 %v161
    %v326 = vunpack.c.l.b16 %v162
    %v327 = vunpack.c.l.b16 %v163
    %v328 = vunpack.c.l.b16 %v164
    %v329 = vunpack.c.l.b16 %v165
    %v330 = vunpack.c.l.b16 %v166
    %v331 = vunpack.c.l.b16 %v167
    %v332 = vunpack.c.l.b16 %v168
    %v333 = vunpack.c.l.b16 %v169
    %v334 = vunpack.c.l.b16 %v170
    %v335 = vunpack.c.l.b16 %v171
    %v336 = vunpack.c.l.b16 %v172
    %v337 = vunpack.c.l.b16 %v173
    %v338 = vunpack.c.l.b16 %v174
    %v339 = vunpack.c.l.b16 %v175
    %v340 = vunpack.c.l.b16 %v176
    %v341 = vunpack.c.l.b16 %v177
    %v342 = vunpack.c.l.b16 %v178
    %v343 = vunpack.c.l.b16 %v179
    %v344 = vunpack.c.l.b16 %v180
    %v345 = vunpack.c.l.b16 %v181
    %v346 = vunpack.c.l.b16 %v182
    %v347 = vunpack.c.l.b16 %v183
    %v348 = vunpack.c.l.b16 %v184
    %v349 = vunpack.c.l.b16 %v185
    %v350 = vunpack.c.l.b16 %v186
    %v351 = vunpack.c.l.b16 %v187
    %v352 = vunpack.c.l.b16 %v188
    %v353 = vunpack.c.l.b16 %v189
    %v354 = vunpack.c.l.b16 %v190
    %v355 = vunpack.c.l.b16 %v191
    %v356 = vunpack.c.l.b16 %v192
    %v357 = vunpack.c.l.b16 %v193
    %v358 = vunpack.c.l.b16 %v194
    %v359 = vunpack.c.l.b16 %v195
    %v360 = vunpack.c.l.b16 %v196
    %v361 = vunpack.c.l.b16 %v197
    %v362 = vunpack.c.l.b16 %v198
    %v363 = vunpack.c.l.b16 %v199
    %v364 = vunpack.c.l.b16 %v200
    %v365 = vunpack.c.l.b16 %v201
    %v366 = vunpack.c.l.b16 %v202
    %v367 = vunpack.c.l.b16 %v203
    %v368 = vunpack.c.l.b16 %v204
    %v369 = vunpack.c.l.b16 %v205
    %v370 = vunpack.c.l.b16 %v206
    %v371 = vunpack.c.l.b16 %v207
    %v372 = vunpack.c.l.b16 %v208
    %v373 = vunpack.c.l.b16 %v209
    %v374 = vunpack.c.l.b16 %v210
    %v375 = vunpack.c.l.b16 %v211
    %v376 = vunpack.c.l.b16 %v212
    %v377 = vunpack.c.l.b16 %v213
    %v378 = vunpack.c.l.b16 %v214
    %v379 = vunpack.c.l.b16 %v215
    %v380 = vunpack.c.l.b16 %v216
    %v381 = vunpack.c.l.b16 %v217
    %v382 = vunpack.c.l.b16 %v218
    %v383 = vunpack.c.l.b16 %v219
    %v384 = vunpack.c.l.b16 %v220
    %v385 = vunpack.c.l.b16 %v221
    %v386 = vunpack.c.l.b16 %v222
    %v387 = vunpack.c.l.b16 %v223
    %v388 = vunpack.c.l.b16 %v224
    %v389 = vunpack.c.l.b16 %v225
    %v390 = vunpack.c.l.b16 %v226
    %v391 = vunpack.c.l.b16 %v227
    %v392 = vunpack.c.l.b16 %v228
    %v393 = vunpack.c.l.b16 %v229
    %v394 = vunpack.c.l.b16 %v230
    %v395 = vunpack.c.l.b16 %v231
    %v396 = vunpack.c.l.b16 %v232
    %v397 = vunpack.c.l.b16 %v233
    %v398 = vunpack.c.l.b16 %v234
    %v399 = vpack.c.b16 %v320, %v319
    %v400 = vpack.c.b16 %v322, %v321
    %v401 = vpack.c.b16 %v324, %v323
    %v402 = vpack.c.b16 %v326, %v325
    %v403 = vpack.c.b16 %v328, %v327
    %v404 = vpack.c.b16 %v330, %v329
    %v405 = vpack.c.b16 %v332, %v331
    %v406 = vpack.c.b16 %v334, %v333
    %v407 = vpack.c.b16 %v336, %v335
    %v408 = vpack.c.b16 %v338, %v337
    %v409 = vpack.c.b16 %v340, %v339
    %v410 = vpack.c.b16 %v342, %v341
    %v411 = vpack.c.b16 %v344, %v343
    %v412 = vpack.c.b16 %v346, %v345
    %v413 = vpack.c.b16 %v348, %v347
    %v414 = vpack.c.b16 %v350, %v349
    %v415 = vpack.c.b16 %v352, %v351
    %v416 = vpack.c.b16 %v354, %v353
    %v417 = vpack.c.b16 %v356, %v355
    %v418 = vpack.c.b16 %v358, %v357
    %v419 = vpack.c.b16 %v360, %v359
    %v420 = vpack.c.b16 %v362, %v361
    %v421 = vpack.c.b16 %v364, %v363
    %v422 = vpack.c.b16 %v366, %v365
    %v423 = vpack.c.b16 %v368, %v367
    %v424 = vpack.c.b16 %v370, %v369
    %v425 = vpack.c.b16 %v372, %v371
    %v426 = vpack.c.b16 %v374, %v373
    %v427 = vpack.c.b16 %v376, %v375
    %v428 = vpack.c.b16 %v378, %v377
    %v429 = vpack.c.b16 %v380, %v379
    %v430 = vpack.c.b16 %v382, %v381
    %v431 = vpack.c.b16 %v384, %v383
    %v432 = vpack.c.b16 %v386, %v385
    %v433 = vpack.c.b16 %v388, %v387
    %v434 = vpack.c.b16 %v390, %v389
    %v435 = vpack.c.b16 %v392, %v391
    %v436 = vpack.c.b16 %v394, %v393
    %v437 = vpack.c.b16 %v396, %v395
    %v438 = vpack.c.b16 %v398, %v397
    %479 = vmatpush.bf16.msra.mxu0 %v406
    %480 = vmatpush.bf16.msra.mxu0 %v405
    %481 = vmatpush.bf16.msra.mxu0 %v404
    %482 = vmatpush.bf16.msra.mxu0 %v403
    %483 = vmatpush.bf16.msra.mxu0 %v402
    %484 = vmatpush.bf16.msra.mxu0 %v401
    %485 = vmatpush.bf16.msra.mxu0 %v400
    %486 = vmatpush.bf16.msra.mxu0 %v399
    %487 = vmatmul.bf16.gmra.mxu0 %v103
    %v488 = vpop.f32.mrf.mxu0
    %v489 = vadd.f32 %v237, %v488
    %v490 = vpop.f32.mrf.mxu0
    %v491 = vadd.f32 %v237, %v490
    %492 = vmatmul.bf16.gmra.mxu0 %v104
    %v493 = vpop.f32.mrf.mxu0
    %v494 = vadd.f32 %v237, %v493
    %v495 = vpop.f32.mrf.mxu0
    %v496 = vadd.f32 %v237, %v495
    %497 = vdwg.mxu0
    %498 = vmatpush.bf16.msra.mxu0 %v414
    %499 = vmatpush.bf16.msra.mxu0 %v413
    %500 = vmatpush.bf16.msra.mxu0 %v412
    %501 = vmatpush.bf16.msra.mxu0 %v411
    %502 = vmatpush.bf16.msra.mxu0 %v410
    %503 = vmatpush.bf16.msra.mxu0 %v409
    %504 = vmatpush.bf16.msra.mxu0 %v408
    %505 = vmatpush.bf16.msra.mxu0 %v407
    %506 = vmatmul.bf16.gmra.mxu0 %v115
    %v507 = vpop.f32.mrf.mxu0
    %v508 = vadd.f32 %v489, %v507
    %v509 = vpop.f32.mrf.mxu0
    %v510 = vadd.f32 %v491, %v509
    %511 = vmatmul.bf16.gmra.mxu0 %v116
    %v512 = vpop.f32.mrf.mxu0
    %v513 = vadd.f32 %v494, %v512
    %v514 = vpop.f32.mrf.mxu0
    %v515 = vadd.f32 %v496, %v514
    %516 = vdwg.mxu0
    %517 = vmatpush.bf16.msra.mxu0 %v422
    %518 = vmatpush.bf16.msra.mxu0 %v421
    %519 = vmatpush.bf16.msra.mxu0 %v420
    %520 = vmatpush.bf16.msra.mxu0 %v419
    %521 = vmatpush.bf16.msra.mxu0 %v418
    %522 = vmatpush.bf16.msra.mxu0 %v417
    %523 = vmatpush.bf16.msra.mxu0 %v416
    %524 = vmatpush.bf16.msra.mxu0 %v415
    %525 = vmatmul.bf16.gmra.mxu0 %v127
    %v526 = vpop.f32.mrf.mxu0
    %v527 = vadd.f32 %v508, %v526
    %v528 = vpop.f32.mrf.mxu0
    %v529 = vadd.f32 %v510, %v528
    %530 = vmatmul.bf16.gmra.mxu0 %v128
    %v531 = vpop.f32.mrf.mxu0
    %v532 = vadd.f32 %v513, %v531
    %v533 = vpop.f32.mrf.mxu0
    %v534 = vadd.f32 %v515, %v533
    %535 = vdwg.mxu0
    %536 = vmatpush.bf16.msra.mxu0 %v430
    %537 = vmatpush.bf16.msra.mxu0 %v429
    %538 = vmatpush.bf16.msra.mxu0 %v428
    %539 = vmatpush.bf16.msra.mxu0 %v427
    %540 = vmatpush.bf16.msra.mxu0 %v426
    %541 = vmatpush.bf16.msra.mxu0 %v425
    %542 = vmatpush.bf16.msra.mxu0 %v424
    %543 = vmatpush.bf16.msra.mxu0 %v423
    %544 = vmatmul.bf16.gmra.mxu0 %v139
    %v545 = vpop.f32.mrf.mxu0
    %v546 = vadd.f32 %v527, %v545
    %v547 = vpop.f32.mrf.mxu0
    %v548 = vadd.f32 %v529, %v547
    %549 = vmatmul.bf16.gmra.mxu0 %v140
    %v550 = vpop.f32.mrf.mxu0
    %v551 = vadd.f32 %v532, %v550
    %v552 = vpop.f32.mrf.mxu0
    %v553 = vadd.f32 %v534, %v552
    %554 = vdwg.mxu0
    %555 = vmatpush.bf16.msra.mxu0 %v438
    %556 = vmatpush.bf16.msra.mxu0 %v437
    %557 = vmatpush.bf16.msra.mxu0 %v436
    %558 = vmatpush.bf16.msra.mxu0 %v435
    %559 = vmatpush.bf16.msra.mxu0 %v434
    %560 = vmatpush.bf16.msra.mxu0 %v433
    %561 = vmatpush.bf16.msra.mxu0 %v432
    %562 = vmatpush.bf16.msra.mxu0 %v431
    %563 = vmatmul.bf16.gmra.mxu0 %v151
    %v564 = vpop.f32.mrf.mxu0
    %v565 = vadd.f32 %v546, %v564
    %v566 = vpop.f32.mrf.mxu0
    %v567 = vadd.f32 %v548, %v566
    %568 = vmatmul.bf16.gmra.mxu0 %v152
    %v569 = vpop.f32.mrf.mxu0
    %v570 = vadd.f32 %v551, %v569
    %v571 = vpop.f32.mrf.mxu0
    %v572 = vadd.f32 %v553, %v571
    %573 = vdwg.mxu0
    %v574 = vmax.f32 %v565, 0.0
    %v575 = vmax.f32 %v567, 0.0
    %v576 = vmax.f32 %v570, 0.0
    %v577 = vmax.f32 %v572, 0.0
    %v578 = vld [vmem:[%s3] sm:$0xff]
    %v579 = vmul.f32 %v574, %v578
    %v580 = vmul.f32 %v575, %v578
    %v581 = vmul.f32 %v576, %v578
    %v582 = vmul.f32 %v577, %v578
    %v583 = vrot.slane %v579, 4
    %v584 = vmax.f32 %v579, %v583
    %v585 = vrot.slane %v584, 2
    %v586 = vmax.f32 %v584, %v585
    %v587 = vrot.slane %v586, 1
    %v588 = vmax.f32 %v586, %v587
    %v589 = vrot.slane %v580, 4
    %v590 = vmax.f32 %v580, %v589
    %v591 = vrot.slane %v590, 2
    %v592 = vmax.f32 %v590, %v591
    %v593 = vrot.slane %v592, 1
    %v594 = vmax.f32 %v592, %v593
    %v595 = vrot.slane %v581, 4
    %v596 = vmax.f32 %v581, %v595
    %v597 = vrot.slane %v596, 2
    %v598 = vmax.f32 %v596, %v597
    %v599 = vrot.slane %v598, 1
    %v600 = vmax.f32 %v598, %v599
    %v601 = vrot.slane %v582, 4
    %v602 = vmax.f32 %v582, %v601
    %v603 = vrot.slane %v602, 2
    %v604 = vmax.f32 %v602, %v603
    %v605 = vrot.slane %v604, 1
    %v606 = vmax.f32 %v604, %v605
    %v607 = vpack.c.bf16 %v588, %v588
    %v608 = vpack.c.bf16 %v594, %v594
    %v609 = vpack.c.bf16 %v600, %v600
    %v610 = vpack.c.bf16 %v606, %v606
    %v615 = vrot.slane %v607, 2
    %v616 = vrot.slane %v608, 2
    %v617 = vrot.slane %v609, 2
    %v618 = vrot.slane %v610, 2
    %vm619 = vcmask 1041408
    %v622 = vsel %vm619, %v607, %v615
    %v625 = vsel %vm619, %v608, %v616
    %v628 = vsel %vm619, %v609, %v617
    %v631 = vsel %vm619, %v610, %v618
    %632 = vst [vmem:[#allocation1] ss:$2 sm:$0xff] %v622
    %v633 = vld.sshfl [vmem:[#allocation1] sm:$0xff pattern:$0x75643120]
    %s635 = scalar_lea.vmem [#allocation1], 16
    %636 = vst [vmem:[%s635] ss:$2 sm:$0xff] %v625
    %v637 = vld.sshfl [vmem:[#allocation1 + $0x10] sm:$0xff pattern:$0x75643120]
    %s639 = scalar_lea.vmem [#allocation1], 32
    %640 = vst [vmem:[%s639] ss:$2 sm:$0xff] %v628
    %v641 = vld.sshfl [vmem:[#allocation1 + $0x20] sm:$0xff pattern:$0x75643120]
    %s643 = scalar_lea.vmem [#allocation1], 48
    %644 = vst [vmem:[%s643] ss:$2 sm:$0xff] %v631
    %v645 = vld.sshfl [vmem:[#allocation1 + $0x30] sm:$0xff pattern:$0x75643120]
    %v647 = vunpack.c.l.b16 %v633
    %v648 = vunpack.c.l.b16 %v637
    %v649 = vunpack.c.l.b16 %v641
    %v650 = vunpack.c.l.b16 %v645
    %v651 = vrot.slane %v648, 7
    %vm652 = vcmask 1041409
    %v653 = vsel %vm652, %v651, %v647
    %v654 = vrot.slane %v649, 6
    %vm655 = vcmask 1042434
    %v656 = vsel %vm655, %v654, %v653
    %v657 = vrot.slane %v650, 5
    %vm658 = vcmask 1043459
    %v659 = vsel %vm658, %v657, %v656
    %v660 = vpack.c.b16 %v659, %v659
    %v661 = vrot.slane %v660, 2
    %v664 = vsel %vm619, %v660, %v661
    %666 = vst [vmem:[%s4] sm:$0x3] %v664
    // Predicated region
    $region22: #{textcnn_forward.2} parent=1 // pred_check
      _
    $region23: #{textcnn_forward.2} parent=1 // pred_check_branch
      %668 = sbr.rel (0) target = $region25
    $region24: #{textcnn_forward.2} parent=1 // pred_region
      _
    $region25: #{textcnn_forward.2} parent=1 // pred_fallthru
      _
    // Predicated region
    $region26: #{textcnn_forward.2} parent=1 // pred_check
      _
    $region27: #{textcnn_forward.2} parent=1 // pred_check_branch
      %670 = sbr.rel (0) target = $region29
    $region28: #{textcnn_forward.2} parent=1 // pred_region
      _
    $region29: #{textcnn_forward.2} parent=1 // pred_fallthru
      _
    %671 = vsyncpa [#allocation3], 1

</llo_original>
